<compile_context>
chip_gen: v7x
topology: tpu7x:2x2x1
jax: 0.10.0
libtpu: 0.0.40
codegen_flags: <defaults>
</compile_context>

<pallas_src>
import jax
import jax.numpy as jnp
from jax.experimental import pallas as pl
from jax.experimental.pallas import tpu as pltpu


# -----------------------------------------------------------------------------
# Pallas kernel: fused 3-layer GCN + mean pooling, tiled over A_hat blocks.
# -----------------------------------------------------------------------------
def structure_encoder_kernel(a_ref,      # [TR, TC]      bf16  A_hat block (r, c)
                             x_hbm,      # [Npad, H]     bf16  node features (pl.ANY / HBM)
                             w_ref,      # [H, H]        bf16  W_l (layer-indexed)
                             b_ref,      # [1, H]        f32   b_l (layer-indexed)
                             p_ref,      # [Gpad, Npad]  f32   pooling matrix (resident)
                             o_ref,      # [Gpad, H]     f32   pooled output (resident)
                             z_ref,      # [Npad, H]     bf16  Z_l = H_{l-1} @ W_l
                             h_ref,      # [Npad, H]     bf16  H_{l-1} (initialized to X)
                             acc_ref,    # [TR, H]       f32   row-tile accumulator
                             dma_sem):   # DMA semaphore for the one-time X copy
    l = pl.program_id(0)
    r = pl.program_id(1)
    c = pl.program_id(2)
    n_l = pl.num_programs(0)
    n_c = pl.num_programs(2)

    TR = acc_ref.shape[0]
    TC = a_ref.shape[1]

    # --- very first grid step: zero pooled output, DMA X -> h_ref exactly once ---
    @pl.when((l == 0) & (r == 0) & (c == 0))
    def _():
        o_ref[...] = jnp.zeros_like(o_ref)
        cp = pltpu.make_async_copy(x_hbm, h_ref, dma_sem)
        cp.start()
        cp.wait()

    col0 = pl.multiple_of(c * TC, TC)
    row0 = pl.multiple_of(r * TR, TR)

    # --- lazy Z: during the first row-tile sweep of each layer, compute the
    #     column tile of Z_l = H_{l-1} @ W_l needed by this step (overlaps with
    #     the A_hat DMA pipeline instead of a serialized full-N matmul). ---------
    @pl.when(r == 0)
    def _():
        z_ref[pl.ds(col0, TC), :] = jnp.dot(
            h_ref[pl.ds(col0, TC), :], w_ref[...],
            preferred_element_type=jnp.float32).astype(z_ref.dtype)

    # --- contraction over A_hat column tiles: acc += A[r, c] @ Z[c] -------------
    @pl.when(c == 0)
    def _():
        acc_ref[...] = jnp.zeros_like(acc_ref)

    acc_ref[...] += jnp.dot(a_ref[...], z_ref[pl.ds(col0, TC), :],
                            preferred_element_type=jnp.float32)

    # --- row-tile epilogue: bias (+ ReLU) in f32, then store / pool --------------
    @pl.when(c == n_c - 1)
    def _():
        h = acc_ref[...] + b_ref[...]            # f32 epilogue (bias broadcast)

        @pl.when(l < n_l - 1)                    # hidden layers: ReLU + store H_l
        def _():
            h_ref[pl.ds(row0, TR), :] = jnp.maximum(h, 0.0).astype(h_ref.dtype)

        @pl.when(l == n_l - 1)                   # last layer: fold in mean pool (f32)
        def _():
            o_ref[...] += jnp.dot(p_ref[:, pl.ds(row0, TR)], h,
                                  preferred_element_type=jnp.float32)


def structure_encoder_pallas(a_hat_p, x_p, w_stack, b_stack, pool_p,
                             *, row_tile=256, col_tile=512):
    """a_hat_p: [Npad, Npad] bf16; x_p: [Npad, H] bf16; w_stack: [L, H, H] bf16;
    b_stack: [L, 1, H] f32; pool_p: [Gpad, Npad] f32.  Returns [Gpad, H] f32.

    Invariant (correctness of the pooled mean): padded A_hat columns/rows and
    padded P columns must be zero so padded node rows never contribute."""
    n_layers, h_dim, _ = w_stack.shape
    n_pad = a_hat_p.shape[0]
    g_pad = pool_p.shape[0]

    # Clamp tiles to the problem; for small graphs (e.g. the shipped test size
    # Npad = 256) this collapses the grid to (L, 1, 1) -> minimal per-step overhead
    # and A_hat is fetched once.
    row_tile = min(row_tile, n_pad)
    col_tile = min(col_tile, n_pad)
    assert n_pad % row_tile == 0 and n_pad % col_tile == 0
    R, C = n_pad // row_tile, n_pad // col_tile

    # VMEM budget derived from the actual tile / scratch byte math (+ headroom).
    vmem_est = (
        2 * row_tile * col_tile * 2          # A_hat double-buffer (bf16)
        + 2 * g_pad * n_pad * 4              # P (resident, double-buffered, f32)
        + 2 * (h_dim * h_dim * 2 + h_dim * 4)  # W_l / b_l double-buffers
        + g_pad * h_dim * 4                  # pooled output block (f32)
        + 2 * n_pad * h_dim * 2              # Z_l + H_l scratch (bf16)
        + row_tile * h_dim * 4               # row-tile accumulator (f32)
    )
    # v5e/v6e have 128 MiB physical VMEM; v7x only 64 MiB -> the O(N) scratch is
    # the binding constraint there.
    vmem_limit = int(min(2 * vmem_est + (8 << 20), 100 << 20))

    grid_spec = pltpu.PrefetchScalarGridSpec(
        num_scalar_prefetch=0,
        grid=(n_layers, R, C),
        in_specs=[
            pl.BlockSpec((row_tile, col_tile), lambda l, r, c: (r, c)),    # A_hat
            pl.BlockSpec(memory_space=pl.ANY),                             # X (HBM, DMA'd once)
            pl.BlockSpec((None, h_dim, h_dim), lambda l, r, c: (l, 0, 0)), # W_l
            pl.BlockSpec((None, 1, h_dim),     lambda l, r, c: (l, 0, 0)), # b_l
            pl.BlockSpec((g_pad, n_pad),       lambda l, r, c: (0, 0)),    # P (resident)
        ],
        out_specs=pl.BlockSpec((g_pad, h_dim), lambda l, r, c: (0, 0)),
        scratch_shapes=[
            pltpu.VMEM((n_pad, h_dim), jnp.bfloat16),     # Z_l
            pltpu.VMEM((n_pad, h_dim), jnp.bfloat16),     # H_{l-1} (holds X at start)
            pltpu.VMEM((row_tile, h_dim), jnp.float32),   # row-tile accumulator
            pltpu.SemaphoreType.DMA,                      # one-time X copy
        ],
    )
    return pl.pallas_call(
        structure_encoder_kernel,
        grid_spec=grid_spec,
        out_shape=jax.ShapeDtypeStruct((g_pad, h_dim), jnp.float32),
        compiler_params=pltpu.CompilerParams(
            dimension_semantics=("arbitrary", "arbitrary", "arbitrary"),
            vmem_limit_bytes=vmem_limit),
    )(a_hat_p, x_p, w_stack, b_stack, pool_p)


# -----------------------------------------------------------------------------
# Plain-JAX glue: dense normalized adjacency, pooling matrix, padding, params.
# -----------------------------------------------------------------------------
def build_normalized_adjacency(edge_index, num_nodes):
    """PyG gcn_norm: directed edges (src -> dst), duplicates summed, self-loops."""
    src, dst = edge_index[0], edge_index[1]
    a = jnp.zeros((num_nodes, num_nodes), jnp.float32)
    a = a.at[dst, src].add(1.0)                       # duplicates sum (PyG parity)
    a = a + jnp.eye(num_nodes, dtype=jnp.float32)     # self-loops
    deg = jnp.sum(a, axis=1)
    d_inv_sqrt = jnp.where(deg > 0, jax.lax.rsqrt(deg), 0.0)
    return d_inv_sqrt[:, None] * a * d_inv_sqrt[None, :]


def build_pool_matrix(batch, num_graphs):
    one_hot = (batch[None, :] == jnp.arange(num_graphs)[:, None]).astype(jnp.float32)
    counts = jnp.maximum(jnp.sum(one_hot, axis=1, keepdims=True), 1.0)
    return one_hot / counts


def pad2d(x, rows, cols):
    out = jnp.zeros((rows, cols), x.dtype)
    return out.at[:x.shape[0], :x.shape[1]].set(x)


def init_params(key, node_features, hidden_dim):
    def glorot(k, fan_in, fan_out):
        limit = jnp.sqrt(6.0 / (fan_in + fan_out))
        return jax.random.uniform(k, (fan_in, fan_out), jnp.float32, -limit, limit)

    ks = jax.random.split(key, 6)
    w1 = glorot(ks[0], node_features, hidden_dim)
    w2 = glorot(ks[1], hidden_dim, hidden_dim)
    w3 = glorot(ks[2], hidden_dim, hidden_dim)
    b1 = 0.1 * jax.random.normal(ks[3], (1, hidden_dim), jnp.float32)
    b2 = 0.1 * jax.random.normal(ks[4], (1, hidden_dim), jnp.float32)
    b3 = 0.1 * jax.random.normal(ks[5], (1, hidden_dim), jnp.float32)
    return [(w1, b1), (w2, b2), (w3, b3)]


def reference_forward(a_hat, x, params, pool_mat):
    (w1, b1), (w2, b2), (w3, b3) = params
    h = jax.nn.relu(a_hat @ (x @ w1) + b1)
    h = jax.nn.relu(a_hat @ (h @ w2) + b2)
    h = a_hat @ (h @ w3) + b3
    return pool_mat @ h


# -----------------------------------------------------------------------------
if __name__ == "__main__":
    key = jax.random.PRNGKey(0)
    k_x, k_e, k_w = jax.random.split(key, 3)

    num_nodes = 200           # total nodes across the batch of graphs
    node_features = 8
    hidden_dim = 128          # module default
    num_graphs = 4
    num_edges = 800

    # Padded sizes (lane-dense, tile-aligned)
    n_pad = ((num_nodes + 127) // 128) * 128      # 256
    g_pad = 8
    f_pad = hidden_dim                            # pad feature dim up to 128

    # Node features
    x = jax.random.normal(k_x, (num_nodes, node_features), jnp.float32)

    # Deterministic edge_index (2, E); edges stay within each graph's node range,
    # like a real PyG mini-batch (block-diagonal adjacency).
    nodes_per_graph = num_nodes // num_graphs
    srcs, dsts = [], []
    for g in range(num_graphs):
        kg = jax.random.fold_in(k_e, g)
        lo, hi = g * nodes_per_graph, (g + 1) * nodes_per_graph
        e = num_edges // num_graphs
        srcs.append(jax.random.randint(jax.random.fold_in(kg, 0), (e,), lo, hi))
        dsts.append(jax.random.randint(jax.random.fold_in(kg, 1), (e,), lo, hi))
    edge_index = jnp.stack([jnp.concatenate(srcs), jnp.concatenate(dsts)], axis=0)

    # batch vector: contiguous graph assignment
    batch = jnp.repeat(jnp.arange(num_graphs, dtype=jnp.int32), nodes_per_graph)

    # Parameters
    params = init_params(k_w, node_features, hidden_dim)
    (w1, b1), (w2, b2), (w3, b3) = params

    # Dense precomputed operators (glue), f32
    a_hat = build_normalized_adjacency(edge_index, num_nodes)
    pool_mat = build_pool_matrix(batch, num_graphs)

    # --- pad + cast for the bf16 MXU path -------------------------------------
    a_hat_p = pad2d(a_hat, n_pad, n_pad).astype(jnp.bfloat16)
    x_p     = pad2d(x, n_pad, f_pad).astype(jnp.bfloat16)
    pool_p  = pad2d(pool_mat, g_pad, n_pad).astype(jnp.float32)   # f32 pooled matmul
    w1_p    = pad2d(w1, f_pad, hidden_dim)                        # zero rows 8..127
    w_stack = jnp.stack([w1_p, w2, w3]).astype(jnp.bfloat16)      # [3, 128, 128]
    b_stack = jnp.stack([b1, b2, b3]).astype(jnp.float32)         # [3, 1, 128]

    # Padding invariant the mean pool relies on (padded node rows do pick up
    # bias/ReLU(bias) values, but padded A_hat / P columns are zero so they
    # never contribute to real nodes or to the pooled mean).
    assert bool(jnp.all(a_hat_p[:, num_nodes:] == 0))
    assert bool(jnp.all(a_hat_p[num_nodes:, :] == 0))
    assert bool(jnp.all(pool_p[:, num_nodes:] == 0))
    assert bool(jnp.all(pool_p[num_graphs:, :] == 0))

    # --- run the fused Pallas kernel -------------------------------------------
    out_full = jax.block_until_ready(
        structure_encoder_pallas(a_hat_p, x_p, w_stack, b_stack, pool_p))
    out = out_full[:num_graphs, :hidden_dim]

    # --- silent correctness check against the plain-JAX f32 reference ----------
    ref = reference_forward(a_hat, x, params, pool_mat)
    assert out.shape == (num_graphs, hidden_dim)
    assert jnp.all(jnp.isfinite(out))
    # bf16 matmul inputs with f32 accumulation vs pure-f32 reference
    assert jnp.allclose(out, ref, atol=3e-2, rtol=3e-2), float(
        jnp.max(jnp.abs(out - ref)))

    print("KERNEL_OK")
</pallas_src>

<mosaic_0001>
module attributes {stable_mosaic.version = 11 : i64} {
  func.func @structure_encoder_kernel(%arg0: i32, %arg1: i32, %arg2: i32, %arg3: memref<256x256xbf16, #tpu.memory_space<vmem>>, %arg4: memref<256x128xbf16, #tpu.memory_space<any>>, %arg5: memref<1x128x128xbf16, #tpu.memory_space<vmem>>, %arg6: memref<1x1x128xf32, #tpu.memory_space<vmem>>, %arg7: memref<8x256xf32, #tpu.memory_space<vmem>>, %arg8: memref<8x128xf32, #tpu.memory_space<vmem>>, %arg9: memref<256x128xbf16, #tpu.memory_space<vmem>>, %arg10: memref<256x128xbf16, #tpu.memory_space<vmem>>, %arg11: memref<256x128xf32, #tpu.memory_space<vmem>>, %arg12: memref<!tpu.dma_semaphore, #tpu.memory_space<semaphore_mem>>) attributes {dimension_semantics = [#tpu.dimension_semantics<arbitrary>, #tpu.dimension_semantics<arbitrary>, #tpu.dimension_semantics<arbitrary>], iteration_bounds = array<i64: 3, 1, 1>, scalar_prefetch = 0 : i64, scratch_operands = 4 : i64, tpu.core_type = #tpu.core_type<tc>, window_params = [{transform_indices = @transform_0, window_bounds = array<i64: 256, 256>}, {}, {transform_indices = @transform_2, window_bounds = array<i64: 1, 128, 128>}, {transform_indices = @transform_3, window_bounds = array<i64: 1, 1, 128>}, {pipeline_mode = #tpu.pipeline_mode<synchronous>, transform_indices = @transform_4, window_bounds = array<i64: 8, 256>}, {pipeline_mode = #tpu.pipeline_mode<synchronous>, transform_indices = @transform_5, window_bounds = array<i64: 8, 128>}]} {
    %c0_i32 = arith.constant 0 : i32
    %0 = arith.cmpi eq, %arg0, %c0_i32 : i32
    %c0_i32_0 = arith.constant 0 : i32
    %1 = arith.cmpi eq, %arg1, %c0_i32_0 : i32
    %2 = arith.andi %0, %1 : i1
    %c0_i32_1 = arith.constant 0 : i32
    %3 = arith.cmpi eq, %arg2, %c0_i32_1 : i32
    %4 = arith.andi %2, %3 : i1
    %5 = arith.extui %4 : i1 to i32
    %c0_i32_2 = arith.constant 0 : i32
    %6 = arith.cmpi ne, %5, %c0_i32_2 : i32
    scf.if %6 {
      %cst_16 = arith.constant 0.000000e+00 : f32
      %27 = vector.broadcast %cst_16 : f32 to vector<8x128xf32>
      %c0_17 = arith.constant 0 : index
      %c0_18 = arith.constant 0 : index
      %28 = vector.load %arg8[%c0_17, %c0_18] : memref<8x128xf32, #tpu.memory_space<vmem>>, vector<8x128xf32>
      tpu.vector_store %arg8[%c0_17, %c0_18], %27 {strides = array<i32>} : memref<8x128xf32, #tpu.memory_space<vmem>>, vector<8x128xf32>,
      tpu.enqueue_dma source(%arg4 : memref<256x128xbf16, #tpu.memory_space<any>>) target(%arg10 : memref<256x128xbf16, #tpu.memory_space<vmem>>) target_semaphore(%arg12 : memref<!tpu.dma_semaphore, #tpu.memory_space<semaphore_mem>>)
      tpu.wait_dma2 semaphore(%arg12 : memref<!tpu.dma_semaphore, #tpu.memory_space<semaphore_mem>>) src(%arg4 : memref<256x128xbf16, #tpu.memory_space<any>>) dst(%arg10 : memref<256x128xbf16, #tpu.memory_space<vmem>>)
    } else {
    }
    %c256_i32 = arith.constant 256 : i32
    %7 = arith.muli %arg2, %c256_i32 : i32
    %8 = tpu.assume_multiple %7, 256 : i32
    %c256_i32_3 = arith.constant 256 : i32
    %9 = arith.muli %arg1, %c256_i32_3 : i32
    %10 = tpu.assume_multiple %9, 256 : i32
    %c0_i32_4 = arith.constant 0 : i32
    %11 = arith.cmpi eq, %arg1, %c0_i32_4 : i32
    %12 = arith.extui %11 : i1 to i32
    %c0_i32_5 = arith.constant 0 : i32
    %13 = arith.cmpi ne, %12, %c0_i32_5 : i32
    scf.if %13 {
      %27 = arith.index_cast %8 : i32 to index
      %c0_16 = arith.constant 0 : index
      %28 = vector.load %arg10[%27, %c0_16] : memref<256x128xbf16, #tpu.memory_space<vmem>>, vector<256x128xbf16>
      %c0_17 = arith.constant 0 : index
      %c0_18 = arith.constant 0 : index
      %c0_19 = arith.constant 0 : index
      %29 = vector.load %arg5[%c0_17, %c0_18, %c0_19] : memref<1x128x128xbf16, #tpu.memory_space<vmem>>, vector<1x128x128xbf16>
      %30 = vector.shape_cast %29 : vector<1x128x128xbf16> to vector<128x128xbf16>
      %cst_20 = arith.constant dense<0.000000e+00> : vector<256x128xf32>
      %31 = tpu.matmul %28, %30, %cst_20 {dimension_numbers = #tpu.dot_dimension_numbers<[1], [0], [0], [1], [0, 0, 1, 1], [], []>} : vector<256x128xbf16>, vector<128x128xbf16>, vector<256x128xf32> -> vector<256x128xf32>
      %32 = arith.truncf %31 : vector<256x128xf32> to vector<256x128xbf16>
      %33 = arith.index_cast %8 : i32 to index
      %c0_21 = arith.constant 0 : index
      %34 = vector.load %arg9[%33, %c0_21] : memref<256x128xbf16, #tpu.memory_space<vmem>>, vector<256x128xbf16>
      tpu.vector_store %arg9[%33, %c0_21], %32 {strides = array<i32>} : memref<256x128xbf16, #tpu.memory_space<vmem>>, vector<256x128xbf16>,
    } else {
    }
    %c0_i32_6 = arith.constant 0 : i32
    %14 = arith.cmpi eq, %arg2, %c0_i32_6 : i32
    %15 = arith.extui %14 : i1 to i32
    %c0_i32_7 = arith.constant 0 : i32
    %16 = arith.cmpi ne, %15, %c0_i32_7 : i32
    scf.if %16 {
      %cst_16 = arith.constant 0.000000e+00 : f32
      %27 = vector.broadcast %cst_16 : f32 to vector<256x128xf32>
      %c0_17 = arith.constant 0 : index
      %c0_18 = arith.constant 0 : index
      %28 = vector.load %arg11[%c0_17, %c0_18] : memref<256x128xf32, #tpu.memory_space<vmem>>, vector<256x128xf32>
      tpu.vector_store %arg11[%c0_17, %c0_18], %27 {strides = array<i32>} : memref<256x128xf32, #tpu.memory_space<vmem>>, vector<256x128xf32>,
    } else {
    }
    %c0 = arith.constant 0 : index
    %c0_8 = arith.constant 0 : index
    %17 = vector.load %arg11[%c0, %c0_8] : memref<256x128xf32, #tpu.memory_space<vmem>>, vector<256x128xf32>
    %c0_9 = arith.constant 0 : index
    %c0_10 = arith.constant 0 : index
    %18 = vector.load %arg3[%c0_9, %c0_10] : memref<256x256xbf16, #tpu.memory_space<vmem>>, vector<256x256xbf16>
    %19 = arith.index_cast %8 : i32 to index
    %c0_11 = arith.constant 0 : index
    %20 = vector.load %arg9[%19, %c0_11] : memref<256x128xbf16, #tpu.memory_space<vmem>>, vector<256x128xbf16>
    %cst = arith.constant dense<0.000000e+00> : vector<256x128xf32>
    %21 = tpu.matmul %18, %20, %cst {dimension_numbers = #tpu.dot_dimension_numbers<[1], [0], [0], [1], [0, 0, 1, 1], [], []>} : vector<256x256xbf16>, vector<256x128xbf16>, vector<256x128xf32> -> vector<256x128xf32>
    %22 = arith.addf %17, %21 : vector<256x128xf32>
    %c0_12 = arith.constant 0 : index
    %c0_13 = arith.constant 0 : index
    %23 = vector.load %arg11[%c0_12, %c0_13] : memref<256x128xf32, #tpu.memory_space<vmem>>, vector<256x128xf32>
    tpu.vector_store %arg11[%c0_12, %c0_13], %22 {strides = array<i32>} : memref<256x128xf32, #tpu.memory_space<vmem>>, vector<256x128xf32>,
    %c0_i32_14 = arith.constant 0 : i32
    %24 = arith.cmpi eq, %arg2, %c0_i32_14 : i32
    %25 = arith.extui %24 : i1 to i32
    %c0_i32_15 = arith.constant 0 : i32
    %26 = arith.cmpi ne, %25, %c0_i32_15 : i32
    scf.if %26 {
      %c0_16 = arith.constant 0 : index
      %c0_17 = arith.constant 0 : index
      %27 = vector.load %arg11[%c0_16, %c0_17] : memref<256x128xf32, #tpu.memory_space<vmem>>, vector<256x128xf32>
      %c0_18 = arith.constant 0 : index
      %c0_19 = arith.constant 0 : index
      %c0_20 = arith.constant 0 : index
      %28 = vector.load %arg6[%c0_18, %c0_19, %c0_20] : memref<1x1x128xf32, #tpu.memory_space<vmem>>, vector<1x1x128xf32>
      %29 = vector.shape_cast %28 : vector<1x1x128xf32> to vector<1x128xf32>
      %30 = vector.broadcast %29 : vector<1x128xf32> to vector<256x128xf32>
      %31 = arith.addf %27, %30 : vector<256x128xf32>
      %c2_i32 = arith.constant 2 : i32
      %32 = arith.cmpi slt, %arg0, %c2_i32 : i32
      %33 = arith.extui %32 : i1 to i32
      %c0_i32_21 = arith.constant 0 : i32
      %34 = arith.cmpi ne, %33, %c0_i32_21 : i32
      scf.if %34 {
        %cst_24 = arith.constant 0.000000e+00 : f32
        %38 = vector.broadcast %cst_24 : f32 to vector<256x128xf32>
        %39 = arith.maximumf %31, %38 : vector<256x128xf32>
        %40 = arith.truncf %39 : vector<256x128xf32> to vector<256x128xbf16>
        %41 = arith.index_cast %10 : i32 to index
        %c0_25 = arith.constant 0 : index
        %42 = vector.load %arg10[%41, %c0_25] : memref<256x128xbf16, #tpu.memory_space<vmem>>, vector<256x128xbf16>
        tpu.vector_store %arg10[%41, %c0_25], %40 {strides = array<i32>} : memref<256x128xbf16, #tpu.memory_space<vmem>>, vector<256x128xbf16>,
      } else {
      }
      %c2_i32_22 = arith.constant 2 : i32
      %35 = arith.cmpi eq, %arg0, %c2_i32_22 : i32
      %36 = arith.extui %35 : i1 to i32
      %c0_i32_23 = arith.constant 0 : i32
      %37 = arith.cmpi ne, %36, %c0_i32_23 : i32
      scf.if %37 {
        %c0_24 = arith.constant 0 : index
        %c0_25 = arith.constant 0 : index
        %38 = vector.load %arg8[%c0_24, %c0_25] : memref<8x128xf32, #tpu.memory_space<vmem>>, vector<8x128xf32>
        %c0_26 = arith.constant 0 : index
        %39 = arith.index_cast %10 : i32 to index
        %40 = vector.load %arg7[%c0_26, %39] : memref<8x256xf32, #tpu.memory_space<vmem>>, vector<8x256xf32>
        %cst_27 = arith.constant dense<0.000000e+00> : vector<8x128xf32>
        %41 = tpu.matmul %40, %31, %cst_27 {dimension_numbers = #tpu.dot_dimension_numbers<[1], [0], [0], [1], [0, 0, 1, 1], [], []>} : vector<8x256xf32>, vector<256x128xf32>, vector<8x128xf32> -> vector<8x128xf32>
        %42 = arith.addf %38, %41 : vector<8x128xf32>
        %c0_28 = arith.constant 0 : index
        %c0_29 = arith.constant 0 : index
        %43 = vector.load %arg8[%c0_28, %c0_29] : memref<8x128xf32, #tpu.memory_space<vmem>>, vector<8x128xf32>
        tpu.vector_store %arg8[%c0_28, %c0_29], %42 {strides = array<i32>} : memref<8x128xf32, #tpu.memory_space<vmem>>, vector<8x128xf32>,
      } else {
      }
    } else {
    }
    return
  }
  func.func @transform_0(%arg0: i32, %arg1: i32, %arg2: i32) -> (i32, i32) {
    %c0_i32 = arith.constant 0 : i32
    return %arg1, %arg2 : i32, i32
  }
  func.func @transform_2(%arg0: i32, %arg1: i32, %arg2: i32) -> (i32, i32, i32) {
    %c0_i32 = arith.constant 0 : i32
    %c0_i32_0 = arith.constant 0 : i32
    %c0_i32_1 = arith.constant 0 : i32
    return %arg0, %c0_i32, %c0_i32_0 : i32, i32, i32
  }
  func.func @transform_3(%arg0: i32, %arg1: i32, %arg2: i32) -> (i32, i32, i32) {
    %c0_i32 = arith.constant 0 : i32
    %c0_i32_0 = arith.constant 0 : i32
    %c0_i32_1 = arith.constant 0 : i32
    return %arg0, %c0_i32, %c0_i32_0 : i32, i32, i32
  }
  func.func @transform_4(%arg0: i32, %arg1: i32, %arg2: i32) -> (i32, i32) {
    %c0_i32 = arith.constant 0 : i32
    %c0_i32_0 = arith.constant 0 : i32
    %c0_i32_1 = arith.constant 0 : i32
    return %c0_i32, %c0_i32_0 : i32, i32
  }
  func.func @transform_5(%arg0: i32, %arg1: i32, %arg2: i32) -> (i32, i32) {
    %c0_i32 = arith.constant 0 : i32
    %c0_i32_0 = arith.constant 0 : i32
    %c0_i32_1 = arith.constant 0 : i32
    return %c0_i32, %c0_i32_0 : i32, i32
  }
}

</mosaic_0001>

<llo_original>
// kernel: tpu_custom_call.1
$region0: #{tpu_custom_call.1}
  #allocation0 [shape = 'u32[]', space=smem, size = 0x4, offset = 0x4, fixed_abs, tag = 'smem constant byte address 0x4 - core index']
  #allocation1 [shape = 'u32[144,128]{1,0:T(1,128)}', space=vmem, size = 0x12000, scoped, tag = 'internal scratch']
  #allocation2 [shape = 'bf16[256,128]{1,0:T(16,128)(2,1)}', space=vmem, size = 0x10000, scoped, tag = 'scratch operand']
  #allocation3 [shape = 'bf16[256,128]{1,0:T(16,128)(2,1)}', space=vmem, size = 0x10000, scoped, tag = 'scratch operand']
  #allocation4 [shape = 'f32[256,128]{1,0:T(8,128)}', space=vmem, size = 0x20000, scoped, tag = 'scratch operand']
  #allocation5 [shape = 's32[1]{0}', space=sflag, size = 0x4, scoped, tag = 'scratch operand']
  #allocation13 [shape = 's32[]', space=sflag, size = 0x4, offset = 0, fixed_abs, tag = 'sflag constant byte address 0x0 - dummy sync flag']
  #allocation14 [shape = 's32[]', space=sflag, size = 0x4, offset = 0, fixed_abs, tag = 'sflag constant byte address 0x0 - dummy sync flag']
  #allocation15 [shape = 'u32[]', space=smem, size = 0x4, offset = 0x44, fixed_abs, tag = 'smem constant byte address 0x44 - assertion arg 0']
  #allocation16 [shape = 'u32[]', space=smem, size = 0x4, offset = 0x48, fixed_abs, tag = 'smem constant byte address 0x48 - assertion arg 1']
  %s0 = inlined_call_operand.hbm [shape: bf16[256,256], index: 0, kind: input, shape index: {}]
  %s1 = inlined_call_operand.hbm [shape: bf16[256,128], index: 1, kind: input, shape index: {}]
  %s2 = inlined_call_operand.hbm [shape: bf16[3,128,128], index: 2, kind: input, shape index: {}]
  %s3 = inlined_call_operand.vmem [shape: f32[3,1,128], index: 3, kind: input, shape index: {}]
  %s4 = inlined_call_operand.hbm [shape: f32[8,256], index: 4, kind: input, shape index: {}]
  %s5 = inlined_call_operand.hbm [shape: f32[8,128], index: 5, kind: output, shape index: {}]
  %s6 = sld [smem:[#allocation0]]
  $region89: #{tpu_custom_call.1} parent=0
    _
  %s8 = ssub.s32 1, %s6
  %s9 = scalar_select 0, %s8, %s6
  $region1: #{tpu_custom_call.1} parent=0
    #allocation6 [shape = 'u8[131072]{0}', space=vmem, size = 0x20000, scoped, tag = 'input window, operand 0, single buffered']
    #allocation7 [shape = 's32[2]{0}', space=sflag, size = 0x8, scoped, tag = 'scoped memory for tpu_custom_call.1']
    #allocation8 [shape = 's32[2]{0}', space=sflag, size = 0x8, scoped, tag = 'scoped memory for tpu_custom_call.1']
    #allocation9 [shape = 'u8[65536]{0}', space=vmem, size = 0x10000, scoped, tag = 'input window, operand 2']
    #allocation10 [shape = 's32[2]{0}', space=sflag, size = 0x8, scoped, tag = 'scoped memory for tpu_custom_call.1']
    #allocation11 [shape = 'u8[8192]{0}', space=vmem, size = 0x2000, scoped, tag = 'input window, operand 4, single buffered']
    #allocation12 [shape = 'u8[4096]{0}', space=vmem, size = 0x1000, scoped, tag = 'output window, operand 0, single buffered']
    %10 = vsyncpa [#allocation7], 0
    %11 = vsyncpa [#allocation10], 0
    %s12 = scalar_lea.sflag [#allocation10], 1
    %13 = vsyncpa %s12, 0
    %14 = vsyncpa [#allocation8], 0
    loop: start=0, step=1, limit=5
    $region2: #{tpu_custom_call.1} parent=1 // loop_pre_header
      _
    $region3: #{tpu_custom_call.1} parent=1 // loop_header
      %s16 = sphi 0, %s20
      %p17 = scmp.ge.s32.totalorder %s16, 5
      %s23 = sphi 0, %s42
      %s24 = sphi 0, %s38
      %s25 = sphi 0, %s34
      %s26 = sphi 0, %s23
      %s27 = sphi 0, %s24
      %s28 = sphi 0, %s25
      %s29 = sphi 0, %s26
      %s30 = sphi 0, %s27
      %s31 = sphi 0, %s28
      %s47 = sphi 0, %s49
      %s50 = sphi 0, %s47
      %s51 = sphi 0, %s50
      %s67 = sphi 0, %s51
      %s73 = sphi 0, %s75
      %s76 = sphi 0, %s73
      %s77 = sphi 0, %s76
      %s93 = sphi 0, %s77
      %s99 = sphi 0, %s101
      %s102 = sphi 0, %s99
      %s103 = sphi 0, %s102
      %s119 = sphi 0, %s103
      %s123 = sphi 0, %s123
      %s125 = sphi 0, %s123
      %s126 = sphi 0, %s125
      %s140 = sphi 0, %s126
      %s144 = sphi 0, %s144
      %s146 = sphi 0, %s144
      %s147 = sphi 0, %s146
      %s161 = sphi 0, %s147
    $region4: #{tpu_custom_call.1} parent=1 // loop_header_branch
      %19 = sbr.rel (%p17) target = $region8
    $region5: #{tpu_custom_call.1} parent=1 // loop_body
      %s21 = ssub.s32 %s16, 1
      %s22 = ssub.s32 %s16, 2
      %s32 = sadd.s32 1, %s25
      %p33 = scmp.ge.s32.totalorder %s32, 1
      %s34 = scalar_select %p33, 0, %s32
      %s35 = sadd.s32 1, %s24
      %s36 = scalar_select %p33, %s35, %s24
      %p37 = scmp.ge.s32.totalorder %s36, 1
      %s38 = scalar_select %p37, 0, %s36
      %s39 = sadd.s32 1, %s23
      %s40 = scalar_select %p37, %s39, %s23
      %p41 = scmp.ge.s32.totalorder %s40, 3
      %s42 = scalar_select %p41, 0, %s40
      %s43 = ssub.s32 %s24, %s38
      %s44 = ssub.s32 %s25, %s34
      %s45 = sor.u32 %s43, %s44
      %p46 = scmp.eq.s32.totalorder %s45, 0
      %s48 = sadd.s32 %s47, 1
      %s49 = scalar_select %p46, %s47, %s48
      %p52 = pneg %p46
      %p53 = scmp.eq.s32.totalorder %s16, 2
      %p54 = por %p52, %p53
      %p55 = scmp.ne.s32.totalorder %s47, %s50
      %p56 = scmp.eq.s32.totalorder %s16, 0
      %p57 = por %p55, %p56
      %p58 = scmp.ne.s32.totalorder %s47, %s50
      %p59 = scmp.eq.s32.totalorder %s21, 2
      %p60 = por %p58, %p59
      %p61 = scmp.ne.s32.totalorder %s50, %s51
      %p62 = scmp.eq.s32.totalorder %s21, 0
      %p63 = por %p61, %p62
      %p64 = scmp.ne.s32.totalorder %s50, %s51
      %p65 = scmp.eq.s32.totalorder %s22, 2
      %p66 = por %p64, %p65
      %p68 = scmp.ne.s32.totalorder %s51, %s67
      %p69 = scmp.eq.s32.totalorder %s22, 0
      %p70 = por %p68, %p69
      %s71 = ssub.s32 %s23, %s42
      %p72 = scmp.eq.s32.totalorder %s71, 0
      %s74 = sadd.s32 %s73, 1
      %s75 = scalar_select %p72, %s73, %s74
      %p78 = pneg %p72
      %p79 = scmp.eq.s32.totalorder %s16, 2
      %p80 = por %p78, %p79
      %p81 = scmp.ne.s32.totalorder %s73, %s76
      %p82 = scmp.eq.s32.totalorder %s16, 0
      %p83 = por %p81, %p82
      %p84 = scmp.ne.s32.totalorder %s73, %s76
      %p85 = scmp.eq.s32.totalorder %s21, 2
      %p86 = por %p84, %p85
      %p87 = scmp.ne.s32.totalorder %s76, %s77
      %p88 = scmp.eq.s32.totalorder %s21, 0
      %p89 = por %p87, %p88
      %p90 = scmp.ne.s32.totalorder %s76, %s77
      %p91 = scmp.eq.s32.totalorder %s22, 2
      %p92 = por %p90, %p91
      %p94 = scmp.ne.s32.totalorder %s77, %s93
      %p95 = scmp.eq.s32.totalorder %s22, 0
      %p96 = por %p94, %p95
      %s97 = ssub.s32 %s23, %s42
      %p98 = scmp.eq.s32.totalorder %s97, 0
      %s100 = sadd.s32 %s99, 1
      %s101 = scalar_select %p98, %s99, %s100
      %p104 = pneg %p98
      %p105 = scmp.eq.s32.totalorder %s16, 2
      %p106 = por %p104, %p105
      %p107 = scmp.ne.s32.totalorder %s99, %s102
      %p108 = scmp.eq.s32.totalorder %s16, 0
      %p109 = por %p107, %p108
      %p110 = scmp.ne.s32.totalorder %s99, %s102
      %p111 = scmp.eq.s32.totalorder %s21, 2
      %p112 = por %p110, %p111
      %p113 = scmp.ne.s32.totalorder %s102, %s103
      %p114 = scmp.eq.s32.totalorder %s21, 0
      %p115 = por %p113, %p114
      %p116 = scmp.ne.s32.totalorder %s102, %s103
      %p117 = scmp.eq.s32.totalorder %s22, 2
      %p118 = por %p116, %p117
      %p120 = scmp.ne.s32.totalorder %s103, %s119
      %p121 = scmp.eq.s32.totalorder %s22, 0
      %p122 = por %p120, %p121
      %s124 = sadd.s32 %s123, 1
      %p127 = scmp.eq.s32.totalorder %s16, 2
      %p128 = scmp.ne.s32.totalorder %s123, %s125
      %p129 = scmp.eq.s32.totalorder %s16, 0
      %p130 = por %p128, %p129
      %p131 = scmp.ne.s32.totalorder %s123, %s125
      %p132 = scmp.eq.s32.totalorder %s21, 2
      %p133 = por %p131, %p132
      %p134 = scmp.ne.s32.totalorder %s125, %s126
      %p135 = scmp.eq.s32.totalorder %s21, 0
      %p136 = por %p134, %p135
      %p137 = scmp.ne.s32.totalorder %s125, %s126
      %p138 = scmp.eq.s32.totalorder %s22, 2
      %p139 = por %p137, %p138
      %p141 = scmp.ne.s32.totalorder %s126, %s140
      %p142 = scmp.eq.s32.totalorder %s22, 0
      %p143 = por %p141, %p142
      %s145 = sadd.s32 %s144, 1
      %p148 = scmp.eq.s32.totalorder %s16, 2
      %p149 = scmp.ne.s32.totalorder %s144, %s146
      %p150 = scmp.eq.s32.totalorder %s16, 0
      %p151 = por %p149, %p150
      %p152 = scmp.ne.s32.totalorder %s144, %s146
      %p153 = scmp.eq.s32.totalorder %s21, 2
      %p154 = por %p152, %p153
      %p155 = scmp.ne.s32.totalorder %s146, %s147
      %p156 = scmp.eq.s32.totalorder %s21, 0
      %p157 = por %p155, %p156
      %p158 = scmp.ne.s32.totalorder %s146, %s147
      %p159 = scmp.eq.s32.totalorder %s22, 2
      %p160 = por %p158, %p159
      %p162 = scmp.ne.s32.totalorder %s147, %s161
      %p163 = scmp.eq.s32.totalorder %s22, 0
      %p164 = por %p162, %p163
      %p165 = scmp.le.s32.totalorder 1, %s16
      %p166 = scmp.lt.s32.totalorder %s16, 4
      %p167 = pnand %p165, %p166
      %p168 = pneg %p167
      // Predicated region
      $region9: #{tpu_custom_call.1} parent=5 // pred_check
        _
      $region10: #{tpu_custom_call.1} parent=5 // pred_check_branch
        %170 = sbr.rel (%p167) target = $region12
      $region11: #{tpu_custom_call.1} parent=5 // pred_region
        %s171 = ssub.s32 %s16, 1
        // Predicated region
        $region13: #{tpu_custom_call.1} parent=11 // pred_check
          %p172 = pneg %p63
        $region14: #{tpu_custom_call.1} parent=11 // pred_check_branch
          %174 = sbr.rel (%p172) target = $region16
        $region15: #{tpu_custom_call.1} parent=11 // pred_region
          %s175 = smul.u32 32, %s27
          %s176 = smul.u32 2, %s28
          %s178 = ssub.s32 4096, 4096
          %179 = vsyncadd [#allocation7], %s178
          %s180 = smul.addr %s175, 2
          %s181 = sadd.s32 %s176, %s180
          %s182 = smul.addr %s181, 64
          %s183 = scalar_lea.hbm %s0, %s182
          %s184 = sshll.u32 [#allocation6], 4
          %s185 = int_to_ptr.vmem [resolvable:$true] %s184
          %190 = dma.hbm_to_vmem [thread:$0]  %s183, 4096, %s185, [#allocation7], 128, 128, 8
        $region16: #{tpu_custom_call.1} parent=11 // pred_fallthru
          _
        // Predicated region
        $region17: #{tpu_custom_call.1} parent=11 // pred_check
          %p191 = pneg %p136
        $region18: #{tpu_custom_call.1} parent=11 // pred_check_branch
          %193 = sbr.rel (%p191) target = $region20
        $region19: #{tpu_custom_call.1} parent=11 // pred_region
          %s195 = ssub.s32 256, 256
          %196 = vsyncadd [#allocation10], %s195
          %s198 = sshll.u32 [#allocation11], 4
          %s199 = int_to_ptr.vmem [resolvable:$true] %s198
          %201 = dma.hbm_to_vmem [thread:$0]  %s4, 256, %s199, [#allocation10]
        $region20: #{tpu_custom_call.1} parent=11 // pred_fallthru
          _
      $region12: #{tpu_custom_call.1} parent=5 // pred_fallthru
        _
      %p202 = scmp.lt.s32.totalorder %s16, 3
      // Predicated region
      $region21: #{tpu_custom_call.1} parent=5 // pred_check
        %p203 = pneg %p202
      $region22: #{tpu_custom_call.1} parent=5 // pred_check_branch
        %205 = sbr.rel (%p203) target = $region24
      $region23: #{tpu_custom_call.1} parent=5 // pred_region
        // Predicated region
        $region25: #{tpu_custom_call.1} parent=23 // pred_check
          %p206 = pneg %p83
        $region26: #{tpu_custom_call.1} parent=23 // pred_check_branch
          %208 = sbr.rel (%p206) target = $region28
        $region27: #{tpu_custom_call.1} parent=23 // pred_region
          %s209 = sand.u32 %s16, 1
          %s210 = scalar_lea.sflag [#allocation10], %s209
          %s211 = sand.u32 %s73, 1
          %s212 = smul.addr %s211, 64
          %s213 = scalar_lea.vmem [#allocation9], %s212
          %s215 = ssub.s32 1024, 1024
          %216 = vsyncadd %s210, %s215
          %s217 = smul.addr %s23, 16
          %s218 = smul.addr %s217, 64
          %s219 = scalar_lea.hbm %s2, %s218
          %s220 = sshll.u32 %s213, 4
          %s221 = int_to_ptr.vmem [resolvable:$true] %s220
          %226 = dma.hbm_to_vmem [thread:$0]  %s219, 1024, %s221, %s210, 64, 64, 4
        $region28: #{tpu_custom_call.1} parent=23 // pred_fallthru
          _
        // Predicated region
        $region29: #{tpu_custom_call.1} parent=23 // pred_check
          %p227 = pneg %p109
        $region30: #{tpu_custom_call.1} parent=23 // pred_check_branch
          %229 = sbr.rel (%p227) target = $region32
        $region31: #{tpu_custom_call.1} parent=23 // pred_region
          %p230 = scmp.lt.s32.totalorder %s23, 2
          %s231 = scalar_select %p230, %s23, 2
          %s232 = scalar_lea.vmem %s3, %s231
        $region32: #{tpu_custom_call.1} parent=23 // pred_fallthru
          _
      $region24: #{tpu_custom_call.1} parent=5 // pred_fallthru
        _
      %p233 = scmp.le.s32.totalorder 1, %s16
      %p234 = scmp.lt.s32.totalorder %s16, 4
      %p235 = pnand %p233, %p234
      %p236 = pneg %p235
      // Predicated region
      $region33: #{tpu_custom_call.1} parent=5 // pred_check
        _
      $region34: #{tpu_custom_call.1} parent=5 // pred_check_branch
        %238 = sbr.rel (%p235) target = $region36
      $region35: #{tpu_custom_call.1} parent=5 // pred_region
        %s239 = ssub.s32 %s16, 1
        // Predicated region
        $region37: #{tpu_custom_call.1} parent=35 // pred_check
          %p240 = pneg %p63
        $region38: #{tpu_custom_call.1} parent=35 // pred_check_branch
          %242 = sbr.rel (%p240) target = $region40
        $region39: #{tpu_custom_call.1} parent=35 // pred_region
          %243 = dma.done [#allocation7], 4096
        $region40: #{tpu_custom_call.1} parent=35 // pred_fallthru
          _
        %s244 = sand.u32 %s21, 1
        %s245 = scalar_lea.sflag [#allocation10], %s244
        %s246 = sand.u32 %s76, 1
        %s247 = smul.addr %s246, 64
        %s248 = scalar_lea.vmem [#allocation9], %s247
        // Predicated region
        $region41: #{tpu_custom_call.1} parent=35 // pred_check
          %p249 = pneg %p89
        $region42: #{tpu_custom_call.1} parent=35 // pred_check_branch
          %251 = sbr.rel (%p249) target = $region44
        $region43: #{tpu_custom_call.1} parent=35 // pred_region
          %252 = dma.done %s245, 1024
        $region44: #{tpu_custom_call.1} parent=35 // pred_fallthru
          _
        // Predicated region
        $region45: #{tpu_custom_call.1} parent=35 // pred_check
          %p253 = pneg %p136
        $region46: #{tpu_custom_call.1} parent=35 // pred_check_branch
          %255 = sbr.rel (%p253) target = $region48
        $region47: #{tpu_custom_call.1} parent=35 // pred_region
          %256 = dma.done [#allocation10], 256
        $region48: #{tpu_custom_call.1} parent=35 // pred_fallthru
          _
        %p257 = pneg %p63
        %p258 = pneg %p60
        %s259 = sand.u32 %s21, 1
        %s260 = scalar_lea.sflag [#allocation10], %s259
        %s261 = sand.u32 %s76, 1
        %s262 = smul.addr %s261, 64
        %s263 = scalar_lea.vmem [#allocation9], %s262
        %p264 = pneg %p89
        %p265 = pneg %p86
        %p266 = scmp.lt.s32.totalorder %s26, 2
        %s267 = scalar_select %p266, %s26, 2
        %s268 = scalar_lea.vmem %s3, %s267
        %p269 = pneg %p115
        %p270 = pneg %p112
        %p271 = pneg %p136
        %p272 = pneg %p133
        %p273 = pneg %p157
        %p274 = pneg %p154
        %s275 = smul.u32 32, %s27
        %s276 = smul.u32 2, %s28
        %p277 = scmp.lt.s32.totalorder %s26, 2
        %s278 = scalar_select %p277, %s26, 2
        %s279 = scalar_lea.vmem %s3, %s278
        %p281 = scmp.eq.s32.totalorder %s26, 0
        %p282 = scmp.eq.s32.totalorder %s27, 0
        %p283 = pnand %p281, %p282
        %p284 = pneg %p283
        %p285 = scmp.eq.s32.totalorder %s28, 0
        %p286 = pnand %p284, %p285
        %p287 = pneg %p286
        // Predicated region
        $region49: #{tpu_custom_call.1} parent=35 // pred_check
          _
        $region50: #{tpu_custom_call.1} parent=35 // pred_check_branch
          %289 = sbr.rel (%p286) target = $region52
        $region51: #{tpu_custom_call.1} parent=35 // pred_region
          %290 = vst [vmem:[#allocation12] sm:$0xff] 0.0
          // Predicated region
          $region53: #{tpu_custom_call.1} parent=51 // pred_check
            _
          $region54: #{tpu_custom_call.1} parent=51 // pred_check_branch
            %292 = sbr.rel target = $region56
          $region55: #{tpu_custom_call.1} parent=51 // pred_region
            %293 = sst [smem:[#allocation15]] [#allocation14]
            %294 = sst [smem:[#allocation16]] [#allocation13]
          $region56: #{tpu_custom_call.1} parent=51 // pred_fallthru
            _
          %296 = shalt.err (0)
          %s298 = sshll.u32 [#allocation3], 4
          %s299 = int_to_ptr.vmem [resolvable:$true] %s298
          %301 = dma.hbm_to_vmem [thread:$0]  %s1, 2048, %s299, [#allocation5]
          %s302 = smul.u32 4, 32
          %s303 = smul.u32 %s302, 1
          %s304 = sshll.u32 %s303, 4
          %305 = dma.done [#allocation5], %s304
        $region52: #{tpu_custom_call.1} parent=35 // pred_fallthru
          _
        %s306 = smul.u32 %s28, 256
        %s307 = smul.u32 %s27, 256
        // Predicated region
        $region57: #{tpu_custom_call.1} parent=35 // pred_check
          %p308 = pneg %p282
        $region58: #{tpu_custom_call.1} parent=35 // pred_check_branch
          %310 = sbr.rel (%p308) target = $region60
        $region59: #{tpu_custom_call.1} parent=35 // pred_region
          %s311 = sshra.s32 %s306, 4
          %s312 = sand.u32 %s306, 15
          %s313 = smul.addr %s311, 8
          %s314 = scalar_lea.vmem [#allocation3], %s313
          %v315 = vld [vmem:[%s314] sm:$0xff]
          %v316 = vld [vmem:[%s314 + $0x8] sm:$0xff]
          %v317 = vld [vmem:[%s314 + $0x10] sm:$0xff]
          %v318 = vld [vmem:[%s314 + $0x18] sm:$0xff]
          %v319 = vld [vmem:[%s314 + $0x20] sm:$0xff]
          %v320 = vld [vmem:[%s314 + $0x28] sm:$0xff]
          %v321 = vld [vmem:[%s314 + $0x30] sm:$0xff]
          %v322 = vld [vmem:[%s314 + $0x38] sm:$0xff]
          %v323 = vld [vmem:[%s314 + $0x40] sm:$0xff]
          %v324 = vld [vmem:[%s314 + $0x48] sm:$0xff]
          %v325 = vld [vmem:[%s314 + $0x50] sm:$0xff]
          %v326 = vld [vmem:[%s314 + $0x58] sm:$0xff]
          %v327 = vld [vmem:[%s314 + $0x60] sm:$0xff]
          %v328 = vld [vmem:[%s314 + $0x68] sm:$0xff]
          %v329 = vld [vmem:[%s314 + $0x70] sm:$0xff]
          %v330 = vld [vmem:[%s314 + $0x78] sm:$0xff]
          %v331 = vld [vmem:[%s248] sm:$0xf]
          %v332 = vld [vmem:[%s248 + $0x4] sm:$0xf]
          %v333 = vld [vmem:[%s248 + $0x8] sm:$0xf]
          %v334 = vld [vmem:[%s248 + $0xc] sm:$0xf]
          %v335 = vld [vmem:[%s248 + $0x10] sm:$0xf]
          %v336 = vld [vmem:[%s248 + $0x14] sm:$0xf]
          %v337 = vld [vmem:[%s248 + $0x18] sm:$0xf]
          %v338 = vld [vmem:[%s248 + $0x1c] sm:$0xf]
          %v339 = vld [vmem:[%s248 + $0x20] sm:$0xf]
          %v340 = vld [vmem:[%s248 + $0x24] sm:$0xf]
          %v341 = vld [vmem:[%s248 + $0x28] sm:$0xf]
          %v342 = vld [vmem:[%s248 + $0x2c] sm:$0xf]
          %v343 = vld [vmem:[%s248 + $0x30] sm:$0xf]
          %v344 = vld [vmem:[%s248 + $0x34] sm:$0xf]
          %v345 = vld [vmem:[%s248 + $0x38] sm:$0xf]
          %v346 = vld [vmem:[%s248 + $0x3c] sm:$0xf]
          %v363 = vunpack.c.l.b16 %v331
          %v364 = vunpack.c.l.b16 %v332
          %v365 = vunpack.c.l.b16 %v333
          %v366 = vunpack.c.l.b16 %v334
          %v367 = vunpack.c.l.b16 %v335
          %v368 = vunpack.c.l.b16 %v336
          %v369 = vunpack.c.l.b16 %v337
          %v370 = vunpack.c.l.b16 %v338
          %v371 = vunpack.c.l.b16 %v339
          %v372 = vunpack.c.l.b16 %v340
          %v373 = vunpack.c.l.b16 %v341
          %v374 = vunpack.c.l.b16 %v342
          %v375 = vunpack.c.l.b16 %v343
          %v376 = vunpack.c.l.b16 %v344
          %v377 = vunpack.c.l.b16 %v345
          %v378 = vunpack.c.l.b16 %v346
          %v379 = vpack.c.b16 %v364, %v363
          %v380 = vpack.c.b16 %v366, %v365
          %v381 = vpack.c.b16 %v368, %v367
          %v382 = vpack.c.b16 %v370, %v369
          %v383 = vpack.c.b16 %v372, %v371
          %v384 = vpack.c.b16 %v374, %v373
          %v385 = vpack.c.b16 %v376, %v375
          %v386 = vpack.c.b16 %v378, %v377
          %395 = vmatprep.subr.bf16.mxu0 0
          %396 = vmatpush1.bf16.msra.mxu0 %v379
          %397 = vmatprep.subr.bf16.mxu0 0
          %398 = vmatpush1.bf16.msra.mxu0 %v380
          %399 = vmatprep.subr.bf16.mxu0 0
          %400 = vmatpush1.bf16.msra.mxu0 %v381
          %401 = vmatprep.subr.bf16.mxu0 0
          %402 = vmatpush1.bf16.msra.mxu0 %v382
          %403 = vmatprep.subr.bf16.mxu0 0
          %404 = vmatpush1.bf16.msra.mxu0 %v383
          %405 = vmatprep.subr.bf16.mxu0 0
          %406 = vmatpush1.bf16.msra.mxu0 %v384
          %407 = vmatprep.subr.bf16.mxu0 0
          %408 = vmatpush1.bf16.msra.mxu0 %v385
          %409 = vmatprep.subr.bf16.mxu0 0
          %410 = vmatpush1.bf16.msra.mxu0 %v386
          %411 = vmatprep.subr.bf16.mxu0 0
          %412 = vmatpush1.bf16.msra.mxu0 0
          %413 = vmatprep.subr.bf16.mxu0 0
          %414 = vmatpush1.bf16.msra.mxu0 0
          %415 = vmatprep.subr.bf16.mxu0 0
          %416 = vmatpush1.bf16.msra.mxu0 0
          %417 = vmatprep.subr.bf16.mxu0 0
          %418 = vmatpush1.bf16.msra.mxu0 0
          %419 = vmatprep.subr.bf16.mxu0 0
          %420 = vmatpush1.bf16.msra.mxu0 0
          %421 = vmatprep.subr.bf16.mxu0 0
          %422 = vmatpush1.bf16.msra.mxu0 0
          %423 = vmatprep.subr.bf16.mxu0 0
          %424 = vmatpush1.bf16.msra.mxu0 0
          %425 = vmatprep.subr.bf16.mxu0 0
          %426 = vmatpush1.bf16.msra.mxu0 0
          %427 = vmatprep.mubr.bf16.mxu0 0
          %428 = vmatmul.mubr.bf16.gmra.mrb[0].mxu0 %v315
          %v429 = vpop.f32.mrb[0].mxu0
          %v430 = vadd.f32 0.0, %v429
          %v431 = vpop.f32.mrb[0].mxu0
          %v432 = vpop.f32.mrb[0].mxu0
          %v433 = vadd.f32 0.0, %v432
          %v434 = vpop.f32.mrb[0].mxu0
          %435 = vmatprep.mubr.bf16.mxu0 0
          %436 = vmatmul.mubr.bf16.gmra.mrb[0].mxu0 %v316
          %v437 = vpop.f32.mrb[0].mxu0
          %v438 = vadd.f32 0.0, %v437
          %v439 = vpop.f32.mrb[0].mxu0
          %v440 = vpop.f32.mrb[0].mxu0
          %v441 = vadd.f32 0.0, %v440
          %v442 = vpop.f32.mrb[0].mxu0
          %443 = vmatprep.mubr.bf16.mxu0 0
          %444 = vmatmul.mubr.bf16.gmra.mrb[0].mxu0 %v317
          %v445 = vpop.f32.mrb[0].mxu0
          %v446 = vadd.f32 0.0, %v445
          %v447 = vpop.f32.mrb[0].mxu0
          %v448 = vpop.f32.mrb[0].mxu0
          %v449 = vadd.f32 0.0, %v448
          %v450 = vpop.f32.mrb[0].mxu0
          %451 = vmatprep.mubr.bf16.mxu0 0
          %452 = vmatmul.mubr.bf16.gmra.mrb[0].mxu0 %v318
          %v453 = vpop.f32.mrb[0].mxu0
          %v454 = vadd.f32 0.0, %v453
          %v455 = vpop.f32.mrb[0].mxu0
          %v456 = vpop.f32.mrb[0].mxu0
          %v457 = vadd.f32 0.0, %v456
          %v458 = vpop.f32.mrb[0].mxu0
          %459 = vmatprep.mubr.bf16.mxu0 0
          %460 = vmatmul.mubr.bf16.gmra.mrb[0].mxu0 %v319
          %v461 = vpop.f32.mrb[0].mxu0
          %v462 = vadd.f32 0.0, %v461
          %v463 = vpop.f32.mrb[0].mxu0
          %v464 = vpop.f32.mrb[0].mxu0
          %v465 = vadd.f32 0.0, %v464
          %v466 = vpop.f32.mrb[0].mxu0
          %467 = vmatprep.mubr.bf16.mxu0 0
          %468 = vmatmul.mubr.bf16.gmra.mrb[0].mxu0 %v320
          %v469 = vpop.f32.mrb[0].mxu0
          %v470 = vadd.f32 0.0, %v469
          %v471 = vpop.f32.mrb[0].mxu0
          %v472 = vpop.f32.mrb[0].mxu0
          %v473 = vadd.f32 0.0, %v472
          %v474 = vpop.f32.mrb[0].mxu0
          %475 = vmatprep.mubr.bf16.mxu0 0
          %476 = vmatmul.mubr.bf16.gmra.mrb[0].mxu0 %v321
          %v477 = vpop.f32.mrb[0].mxu0
          %v478 = vadd.f32 0.0, %v477
          %v479 = vpop.f32.mrb[0].mxu0
          %v480 = vpop.f32.mrb[0].mxu0
          %v481 = vadd.f32 0.0, %v480
          %v482 = vpop.f32.mrb[0].mxu0
          %483 = vmatprep.mubr.bf16.mxu0 0
          %484 = vmatmul.mubr.bf16.gmra.mrb[0].mxu0 %v322
          %v485 = vpop.f32.mrb[0].mxu0
          %v486 = vadd.f32 0.0, %v485
          %v487 = vpop.f32.mrb[0].mxu0
          %v488 = vpop.f32.mrb[0].mxu0
          %v489 = vadd.f32 0.0, %v488
          %v490 = vpop.f32.mrb[0].mxu0
          %491 = vmatprep.mubr.bf16.mxu0 0
          %492 = vmatmul.mubr.bf16.gmra.mrb[0].mxu0 %v323
          %v493 = vpop.f32.mrb[0].mxu0
          %v494 = vadd.f32 0.0, %v493
          %v495 = vpop.f32.mrb[0].mxu0
          %v496 = vpop.f32.mrb[0].mxu0
          %v497 = vadd.f32 0.0, %v496
          %v498 = vpop.f32.mrb[0].mxu0
          %499 = vmatprep.mubr.bf16.mxu0 0
          %500 = vmatmul.mubr.bf16.gmra.mrb[0].mxu0 %v324
          %v501 = vpop.f32.mrb[0].mxu0
          %v502 = vadd.f32 0.0, %v501
          %v503 = vpop.f32.mrb[0].mxu0
          %v504 = vpop.f32.mrb[0].mxu0
          %v505 = vadd.f32 0.0, %v504
          %v506 = vpop.f32.mrb[0].mxu0
          %507 = vmatprep.mubr.bf16.mxu0 0
          %508 = vmatmul.mubr.bf16.gmra.mrb[0].mxu0 %v325
          %v509 = vpop.f32.mrb[0].mxu0
          %v510 = vadd.f32 0.0, %v509
          %v511 = vpop.f32.mrb[0].mxu0
          %v512 = vpop.f32.mrb[0].mxu0
          %v513 = vadd.f32 0.0, %v512
          %v514 = vpop.f32.mrb[0].mxu0
          %515 = vmatprep.mubr.bf16.mxu0 0
          %516 = vmatmul.mubr.bf16.gmra.mrb[0].mxu0 %v326
          %v517 = vpop.f32.mrb[0].mxu0
          %v518 = vadd.f32 0.0, %v517
          %v519 = vpop.f32.mrb[0].mxu0
          %v520 = vpop.f32.mrb[0].mxu0
          %v521 = vadd.f32 0.0, %v520
          %v522 = vpop.f32.mrb[0].mxu0
          %523 = vmatprep.mubr.bf16.mxu0 0
          %524 = vmatmul.mubr.bf16.gmra.mrb[0].mxu0 %v327
          %v525 = vpop.f32.mrb[0].mxu0
          %v526 = vadd.f32 0.0, %v525
          %v527 = vpop.f32.mrb[0].mxu0
          %v528 = vpop.f32.mrb[0].mxu0
          %v529 = vadd.f32 0.0, %v528
          %v530 = vpop.f32.mrb[0].mxu0
          %531 = vmatprep.mubr.bf16.mxu0 0
          %532 = vmatmul.mubr.bf16.gmra.mrb[0].mxu0 %v328
          %v533 = vpop.f32.mrb[0].mxu0
          %v534 = vadd.f32 0.0, %v533
          %v535 = vpop.f32.mrb[0].mxu0
          %v536 = vpop.f32.mrb[0].mxu0
          %v537 = vadd.f32 0.0, %v536
          %v538 = vpop.f32.mrb[0].mxu0
          %539 = vmatprep.mubr.bf16.mxu0 0
          %540 = vmatmul.mubr.bf16.gmra.mrb[0].mxu0 %v329
          %v541 = vpop.f32.mrb[0].mxu0
          %v542 = vadd.f32 0.0, %v541
          %v543 = vpop.f32.mrb[0].mxu0
          %v544 = vpop.f32.mrb[0].mxu0
          %v545 = vadd.f32 0.0, %v544
          %v546 = vpop.f32.mrb[0].mxu0
          %547 = vmatprep.mubr.bf16.mxu0 0
          %548 = vmatmul.mubr.bf16.gmra.mrb[0].mxu0 %v330
          %v549 = vpop.f32.mrb[0].mxu0
          %v550 = vadd.f32 0.0, %v549
          %v551 = vpop.f32.mrb[0].mxu0
          %v552 = vpop.f32.mrb[0].mxu0
          %v553 = vadd.f32 0.0, %v552
          %v554 = vpop.f32.mrb[0].mxu0
          %555 = vdwg.mxu0
          %v556 = vpack.c.bf16 %v433, %v430
          %v557 = vpack.c.bf16 %v441, %v438
          %v558 = vpack.c.bf16 %v449, %v446
          %v559 = vpack.c.bf16 %v457, %v454
          %v560 = vpack.c.bf16 %v465, %v462
          %v561 = vpack.c.bf16 %v473, %v470
          %v562 = vpack.c.bf16 %v481, %v478
          %v563 = vpack.c.bf16 %v489, %v486
          %v564 = vpack.c.bf16 %v497, %v494
          %v565 = vpack.c.bf16 %v505, %v502
          %v566 = vpack.c.bf16 %v513, %v510
          %v567 = vpack.c.bf16 %v521, %v518
          %v568 = vpack.c.bf16 %v529, %v526
          %v569 = vpack.c.bf16 %v537, %v534
          %v570 = vpack.c.bf16 %v545, %v542
          %v571 = vpack.c.bf16 %v553, %v550
          %s572 = smul.addr %s311, 8
          %s573 = scalar_lea.vmem [#allocation2], %s572
          %574 = vst [vmem:[%s573] sm:$0xff] %v556
          %575 = vst [vmem:[%s573 + $0x8] sm:$0xff] %v557
          %576 = vst [vmem:[%s573 + $0x10] sm:$0xff] %v558
          %577 = vst [vmem:[%s573 + $0x18] sm:$0xff] %v559
          %578 = vst [vmem:[%s573 + $0x20] sm:$0xff] %v560
          %579 = vst [vmem:[%s573 + $0x28] sm:$0xff] %v561
          %580 = vst [vmem:[%s573 + $0x30] sm:$0xff] %v562
          %581 = vst [vmem:[%s573 + $0x38] sm:$0xff] %v563
          %582 = vst [vmem:[%s573 + $0x40] sm:$0xff] %v564
          %583 = vst [vmem:[%s573 + $0x48] sm:$0xff] %v565
          %584 = vst [vmem:[%s573 + $0x50] sm:$0xff] %v566
          %585 = vst [vmem:[%s573 + $0x58] sm:$0xff] %v567
          %586 = vst [vmem:[%s573 + $0x60] sm:$0xff] %v568
          %587 = vst [vmem:[%s573 + $0x68] sm:$0xff] %v569
          %588 = vst [vmem:[%s573 + $0x70] sm:$0xff] %v570
          %589 = vst [vmem:[%s573 + $0x78] sm:$0xff] %v571
        $region60: #{tpu_custom_call.1} parent=35 // pred_fallthru
          _
        // Predicated region
        $region61: #{tpu_custom_call.1} parent=35 // pred_check
          %p590 = pneg %p285
        $region62: #{tpu_custom_call.1} parent=35 // pred_check_branch
          %592 = sbr.rel (%p590) target = $region64
        $region63: #{tpu_custom_call.1} parent=35 // pred_region
          %593 = vst [vmem:[#allocation4] sm:$0xff] 0.0
          %594 = vst [vmem:[#allocation4 + $0x8] sm:$0xff] 0.0
          %595 = vst [vmem:[#allocation4 + $0x10] sm:$0xff] 0.0
          %596 = vst [vmem:[#allocation4 + $0x18] sm:$0xff] 0.0
          %597 = vst [vmem:[#allocation4 + $0x20] sm:$0xff] 0.0
          %598 = vst [vmem:[#allocation4 + $0x28] sm:$0xff] 0.0
          %599 = vst [vmem:[#allocation4 + $0x30] sm:$0xff] 0.0
          %600 = vst [vmem:[#allocation4 + $0x38] sm:$0xff] 0.0
          %601 = vst [vmem:[#allocation4 + $0x40] sm:$0xff] 0.0
          %602 = vst [vmem:[#allocation4 + $0x48] sm:$0xff] 0.0
          %603 = vst [vmem:[#allocation4 + $0x50] sm:$0xff] 0.0
          %604 = vst [vmem:[#allocation4 + $0x58] sm:$0xff] 0.0
          %605 = vst [vmem:[#allocation4 + $0x60] sm:$0xff] 0.0
          %606 = vst [vmem:[#allocation4 + $0x68] sm:$0xff] 0.0
          %607 = vst [vmem:[#allocation4 + $0x70] sm:$0xff] 0.0
          %608 = vst [vmem:[#allocation4 + $0x78] sm:$0xff] 0.0
          %609 = vst [vmem:[#allocation4 + $0x80] sm:$0xff] 0.0
          %610 = vst [vmem:[#allocation4 + $0x88] sm:$0xff] 0.0
          %611 = vst [vmem:[#allocation4 + $0x90] sm:$0xff] 0.0
          %612 = vst [vmem:[#allocation4 + $0x98] sm:$0xff] 0.0
          %613 = vst [vmem:[#allocation4 + $0xa0] sm:$0xff] 0.0
          %614 = vst [vmem:[#allocation4 + $0xa8] sm:$0xff] 0.0
          %615 = vst [vmem:[#allocation4 + $0xb0] sm:$0xff] 0.0
          %616 = vst [vmem:[#allocation4 + $0xb8] sm:$0xff] 0.0
          %617 = vst [vmem:[#allocation4 + $0xc0] sm:$0xff] 0.0
          %618 = vst [vmem:[#allocation4 + $0xc8] sm:$0xff] 0.0
          %619 = vst [vmem:[#allocation4 + $0xd0] sm:$0xff] 0.0
          %620 = vst [vmem:[#allocation4 + $0xd8] sm:$0xff] 0.0
          %621 = vst [vmem:[#allocation4 + $0xe0] sm:$0xff] 0.0
          %622 = vst [vmem:[#allocation4 + $0xe8] sm:$0xff] 0.0
          %623 = vst [vmem:[#allocation4 + $0xf0] sm:$0xff] 0.0
          %624 = vst [vmem:[#allocation4 + $0xf8] sm:$0xff] 0.0
        $region64: #{tpu_custom_call.1} parent=35 // pred_fallthru
          _
        %v625 = vld [vmem:[#allocation4] sm:$0xff]
        %v626 = vld [vmem:[#allocation4 + $0x8] sm:$0xff]
        %v627 = vld [vmem:[#allocation4 + $0x10] sm:$0xff]
        %v628 = vld [vmem:[#allocation4 + $0x18] sm:$0xff]
        %v629 = vld [vmem:[#allocation4 + $0x20] sm:$0xff]
        %v630 = vld [vmem:[#allocation4 + $0x28] sm:$0xff]
        %v631 = vld [vmem:[#allocation4 + $0x30] sm:$0xff]
        %v632 = vld [vmem:[#allocation4 + $0x38] sm:$0xff]
        %v633 = vld [vmem:[#allocation4 + $0x40] sm:$0xff]
        %v634 = vld [vmem:[#allocation4 + $0x48] sm:$0xff]
        %v635 = vld [vmem:[#allocation4 + $0x50] sm:$0xff]
        %v636 = vld [vmem:[#allocation4 + $0x58] sm:$0xff]
        %v637 = vld [vmem:[#allocation4 + $0x60] sm:$0xff]
        %v638 = vld [vmem:[#allocation4 + $0x68] sm:$0xff]
        %v639 = vld [vmem:[#allocation4 + $0x70] sm:$0xff]
        %v640 = vld [vmem:[#allocation4 + $0x78] sm:$0xff]
        %v641 = vld [vmem:[#allocation4 + $0x80] sm:$0xff]
        %v642 = vld [vmem:[#allocation4 + $0x88] sm:$0xff]
        %v643 = vld [vmem:[#allocation4 + $0x90] sm:$0xff]
        %v644 = vld [vmem:[#allocation4 + $0x98] sm:$0xff]
        %v645 = vld [vmem:[#allocation4 + $0xa0] sm:$0xff]
        %v646 = vld [vmem:[#allocation4 + $0xa8] sm:$0xff]
        %v647 = vld [vmem:[#allocation4 + $0xb0] sm:$0xff]
        %v648 = vld [vmem:[#allocation4 + $0xb8] sm:$0xff]
        %v649 = vld [vmem:[#allocation4 + $0xc0] sm:$0xff]
        %v650 = vld [vmem:[#allocation4 + $0xc8] sm:$0xff]
        %v651 = vld [vmem:[#allocation4 + $0xd0] sm:$0xff]
        %v652 = vld [vmem:[#allocation4 + $0xd8] sm:$0xff]
        %v653 = vld [vmem:[#allocation4 + $0xe0] sm:$0xff]
        %v654 = vld [vmem:[#allocation4 + $0xe8] sm:$0xff]
        %v655 = vld [vmem:[#allocation4 + $0xf0] sm:$0xff]
        %v656 = vld [vmem:[#allocation4 + $0xf8] sm:$0xff]
        %v657 = vld [vmem:[#allocation6] sm:$0xff]
        %v658 = vld [vmem:[#allocation6 + $0x8] sm:$0xff]
        %v659 = vld [vmem:[#allocation6 + $0x10] sm:$0xff]
        %v660 = vld [vmem:[#allocation6 + $0x18] sm:$0xff]
        %v661 = vld [vmem:[#allocation6 + $0x20] sm:$0xff]
        %v662 = vld [vmem:[#allocation6 + $0x28] sm:$0xff]
        %v663 = vld [vmem:[#allocation6 + $0x30] sm:$0xff]
        %v664 = vld [vmem:[#allocation6 + $0x38] sm:$0xff]
        %v665 = vld [vmem:[#allocation6 + $0x40] sm:$0xff]
        %v666 = vld [vmem:[#allocation6 + $0x48] sm:$0xff]
        %v667 = vld [vmem:[#allocation6 + $0x50] sm:$0xff]
        %v668 = vld [vmem:[#allocation6 + $0x58] sm:$0xff]
        %v669 = vld [vmem:[#allocation6 + $0x60] sm:$0xff]
        %v670 = vld [vmem:[#allocation6 + $0x68] sm:$0xff]
        %v671 = vld [vmem:[#allocation6 + $0x70] sm:$0xff]
        %v672 = vld [vmem:[#allocation6 + $0x78] sm:$0xff]
        %v673 = vld [vmem:[#allocation6 + $0x80] sm:$0xff]
        %v674 = vld [vmem:[#allocation6 + $0x88] sm:$0xff]
        %v675 = vld [vmem:[#allocation6 + $0x90] sm:$0xff]
        %v676 = vld [vmem:[#allocation6 + $0x98] sm:$0xff]
        %v677 = vld [vmem:[#allocation6 + $0xa0] sm:$0xff]
        %v678 = vld [vmem:[#allocation6 + $0xa8] sm:$0xff]
        %v679 = vld [vmem:[#allocation6 + $0xb0] sm:$0xff]
        %v680 = vld [vmem:[#allocation6 + $0xb8] sm:$0xff]
        %v681 = vld [vmem:[#allocation6 + $0xc0] sm:$0xff]
        %v682 = vld [vmem:[#allocation6 + $0xc8] sm:$0xff]
        %v683 = vld [vmem:[#allocation6 + $0xd0] sm:$0xff]
        %v684 = vld [vmem:[#allocation6 + $0xd8] sm:$0xff]
        %v685 = vld [vmem:[#allocation6 + $0xe0] sm:$0xff]
        %v686 = vld [vmem:[#allocation6 + $0xe8] sm:$0xff]
        %v687 = vld [vmem:[#allocation6 + $0xf0] sm:$0xff]
        %v688 = vld [vmem:[#allocation6 + $0xf8] sm:$0xff]
        %s689 = sshra.s32 %s306, 4
        %s690 = sand.u32 %s306, 15
        %s691 = smul.addr %s689, 8
        %s692 = scalar_lea.vmem [#allocation2], %s691
        %v693 = vld [vmem:[%s692] sm:$0xff]
        %v694 = vld [vmem:[%s692 + $0x8] sm:$0xff]
        %v695 = vld [vmem:[%s692 + $0x10] sm:$0xff]
        %v696 = vld [vmem:[%s692 + $0x18] sm:$0xff]
        %v697 = vld [vmem:[%s692 + $0x20] sm:$0xff]
        %v698 = vld [vmem:[%s692 + $0x28] sm:$0xff]
        %v699 = vld [vmem:[%s692 + $0x30] sm:$0xff]
        %v700 = vld [vmem:[%s692 + $0x38] sm:$0xff]
        %v701 = vld [vmem:[%s692 + $0x40] sm:$0xff]
        %v702 = vld [vmem:[%s692 + $0x48] sm:$0xff]
        %v703 = vld [vmem:[%s692 + $0x50] sm:$0xff]
        %v704 = vld [vmem:[%s692 + $0x58] sm:$0xff]
        %v705 = vld [vmem:[%s692 + $0x60] sm:$0xff]
        %v706 = vld [vmem:[%s692 + $0x68] sm:$0xff]
        %v707 = vld [vmem:[%s692 + $0x70] sm:$0xff]
        %v708 = vld [vmem:[%s692 + $0x78] sm:$0xff]
        %v741 = vunpack.c.l.b16 %v657
        %v742 = vunpack.c.h.b16 %v657
        %v743 = vunpack.c.l.b16 %v658
        %v744 = vunpack.c.h.b16 %v658
        %v745 = vunpack.c.l.b16 %v659
        %v746 = vunpack.c.h.b16 %v659
        %v747 = vunpack.c.l.b16 %v660
        %v748 = vunpack.c.h.b16 %v660
        %v749 = vunpack.c.l.b16 %v661
        %v750 = vunpack.c.h.b16 %v661
        %v751 = vunpack.c.l.b16 %v662
        %v752 = vunpack.c.h.b16 %v662
        %v753 = vunpack.c.l.b16 %v663
        %v754 = vunpack.c.h.b16 %v663
        %v755 = vunpack.c.l.b16 %v664
        %v756 = vunpack.c.h.b16 %v664
        %v757 = vunpack.c.l.b16 %v665
        %v758 = vunpack.c.h.b16 %v665
        %v759 = vunpack.c.l.b16 %v666
        %v760 = vunpack.c.h.b16 %v666
        %v761 = vunpack.c.l.b16 %v667
        %v762 = vunpack.c.h.b16 %v667
        %v763 = vunpack.c.l.b16 %v668
        %v764 = vunpack.c.h.b16 %v668
        %v765 = vunpack.c.l.b16 %v669
        %v766 = vunpack.c.h.b16 %v669
        %v767 = vunpack.c.l.b16 %v670
        %v768 = vunpack.c.h.b16 %v670
        %v769 = vunpack.c.l.b16 %v671
        %v770 = vunpack.c.h.b16 %v671
        %v771 = vunpack.c.l.b16 %v672
        %v772 = vunpack.c.h.b16 %v672
        %v773 = vunpack.c.l.b16 %v673
        %v774 = vunpack.c.h.b16 %v673
        %v775 = vunpack.c.l.b16 %v674
        %v776 = vunpack.c.h.b16 %v674
        %v777 = vunpack.c.l.b16 %v675
        %v778 = vunpack.c.h.b16 %v675
        %v779 = vunpack.c.l.b16 %v676
        %v780 = vunpack.c.h.b16 %v676
        %v781 = vunpack.c.l.b16 %v677
        %v782 = vunpack.c.h.b16 %v677
        %v783 = vunpack.c.l.b16 %v678
        %v784 = vunpack.c.h.b16 %v678
        %v785 = vunpack.c.l.b16 %v679
        %v786 = vunpack.c.h.b16 %v679
        %v787 = vunpack.c.l.b16 %v680
        %v788 = vunpack.c.h.b16 %v680
        %v789 = vunpack.c.l.b16 %v681
        %v790 = vunpack.c.h.b16 %v681
        %v791 = vunpack.c.l.b16 %v682
        %v792 = vunpack.c.h.b16 %v682
        %v793 = vunpack.c.l.b16 %v683
        %v794 = vunpack.c.h.b16 %v683
        %v795 = vunpack.c.l.b16 %v684
        %v796 = vunpack.c.h.b16 %v684
        %v797 = vunpack.c.l.b16 %v685
        %v798 = vunpack.c.h.b16 %v685
        %v799 = vunpack.c.l.b16 %v686
        %v800 = vunpack.c.h.b16 %v686
        %v801 = vunpack.c.l.b16 %v687
        %v802 = vunpack.c.h.b16 %v687
        %v803 = vunpack.c.l.b16 %v688
        %v804 = vunpack.c.h.b16 %v688
        %v805 = vpack.c.b16 %v743, %v741
        %v806 = vpack.c.b16 %v744, %v742
        %v807 = vpack.c.b16 %v747, %v745
        %v808 = vpack.c.b16 %v748, %v746
        %v809 = vpack.c.b16 %v751, %v749
        %v810 = vpack.c.b16 %v752, %v750
        %v811 = vpack.c.b16 %v755, %v753
        %v812 = vpack.c.b16 %v756, %v754
        %v813 = vpack.c.b16 %v759, %v757
        %v814 = vpack.c.b16 %v760, %v758
        %v815 = vpack.c.b16 %v763, %v761
        %v816 = vpack.c.b16 %v764, %v762
        %v817 = vpack.c.b16 %v767, %v765
        %v818 = vpack.c.b16 %v768, %v766
        %v819 = vpack.c.b16 %v771, %v769
        %v820 = vpack.c.b16 %v772, %v770
        %v821 = vpack.c.b16 %v775, %v773
        %v822 = vpack.c.b16 %v776, %v774
        %v823 = vpack.c.b16 %v779, %v777
        %v824 = vpack.c.b16 %v780, %v778
        %v825 = vpack.c.b16 %v783, %v781
        %v826 = vpack.c.b16 %v784, %v782
        %v827 = vpack.c.b16 %v787, %v785
        %v828 = vpack.c.b16 %v788, %v786
        %v829 = vpack.c.b16 %v791, %v789
        %v830 = vpack.c.b16 %v792, %v790
        %v831 = vpack.c.b16 %v795, %v793
        %v832 = vpack.c.b16 %v796, %v794
        %v833 = vpack.c.b16 %v799, %v797
        %v834 = vpack.c.b16 %v800, %v798
        %v835 = vpack.c.b16 %v803, %v801
        %v836 = vpack.c.b16 %v804, %v802
        %869 = vmatprep.subr.bf16.mxu0 0
        %870 = vmatpush1.bf16.msra.mxu0 %v693
        %871 = vmatprep.subr.bf16.mxu0 0
        %872 = vmatpush1.bf16.msra.mxu0 %v694
        %873 = vmatprep.subr.bf16.mxu0 0
        %874 = vmatpush1.bf16.msra.mxu0 %v695
        %875 = vmatprep.subr.bf16.mxu0 0
        %876 = vmatpush1.bf16.msra.mxu0 %v696
        %877 = vmatprep.subr.bf16.mxu0 0
        %878 = vmatpush1.bf16.msra.mxu0 %v697
        %879 = vmatprep.subr.bf16.mxu0 0
        %880 = vmatpush1.bf16.msra.mxu0 %v698
        %881 = vmatprep.subr.bf16.mxu0 0
        %882 = vmatpush1.bf16.msra.mxu0 %v699
        %883 = vmatprep.subr.bf16.mxu0 0
        %884 = vmatpush1.bf16.msra.mxu0 %v700
        %885 = vmatprep.subr.bf16.mxu0 0
        %886 = vmatpush1.bf16.msra.mxu0 %v701
        %887 = vmatprep.subr.bf16.mxu0 0
        %888 = vmatpush1.bf16.msra.mxu0 %v702
        %889 = vmatprep.subr.bf16.mxu0 0
        %890 = vmatpush1.bf16.msra.mxu0 %v703
        %891 = vmatprep.subr.bf16.mxu0 0
        %892 = vmatpush1.bf16.msra.mxu0 %v704
        %893 = vmatprep.subr.bf16.mxu0 0
        %894 = vmatpush1.bf16.msra.mxu0 %v705
        %895 = vmatprep.subr.bf16.mxu0 0
        %896 = vmatpush1.bf16.msra.mxu0 %v706
        %897 = vmatprep.subr.bf16.mxu0 0
        %898 = vmatpush1.bf16.msra.mxu0 %v707
        %899 = vmatprep.subr.bf16.mxu0 0
        %900 = vmatpush1.bf16.msra.mxu0 %v708
        %901 = vmatprep.mubr.bf16.mxu0 %v806
        %902 = vmatmul.mubr.bf16.gmra.mrb[0].mxu0 %v805
        %v903 = vpop.f32.mrb[0].mxu0
        %v904 = vadd.f32 0.0, %v903
        %v905 = vpop.f32.mrb[0].mxu0
        %v906 = vpop.f32.mrb[0].mxu0
        %v907 = vadd.f32 0.0, %v906
        %v908 = vpop.f32.mrb[0].mxu0
        %909 = vmatprep.mubr.bf16.mxu0 %v808
        %910 = vmatmul.mubr.bf16.gmra.mrb[0].mxu0 %v807
        %v911 = vpop.f32.mrb[0].mxu0
        %v912 = vadd.f32 0.0, %v911
        %v913 = vpop.f32.mrb[0].mxu0
        %v914 = vpop.f32.mrb[0].mxu0
        %v915 = vadd.f32 0.0, %v914
        %v916 = vpop.f32.mrb[0].mxu0
        %917 = vmatprep.mubr.bf16.mxu0 %v810
        %918 = vmatmul.mubr.bf16.gmra.mrb[0].mxu0 %v809
        %v919 = vpop.f32.mrb[0].mxu0
        %v920 = vadd.f32 0.0, %v919
        %v921 = vpop.f32.mrb[0].mxu0
        %v922 = vpop.f32.mrb[0].mxu0
        %v923 = vadd.f32 0.0, %v922
        %v924 = vpop.f32.mrb[0].mxu0
        %925 = vmatprep.mubr.bf16.mxu0 %v812
        %926 = vmatmul.mubr.bf16.gmra.mrb[0].mxu0 %v811
        %v927 = vpop.f32.mrb[0].mxu0
        %v928 = vadd.f32 0.0, %v927
        %v929 = vpop.f32.mrb[0].mxu0
        %v930 = vpop.f32.mrb[0].mxu0
        %v931 = vadd.f32 0.0, %v930
        %v932 = vpop.f32.mrb[0].mxu0
        %933 = vmatprep.mubr.bf16.mxu0 %v814
        %934 = vmatmul.mubr.bf16.gmra.mrb[0].mxu0 %v813
        %v935 = vpop.f32.mrb[0].mxu0
        %v936 = vadd.f32 0.0, %v935
        %v937 = vpop.f32.mrb[0].mxu0
        %v938 = vpop.f32.mrb[0].mxu0
        %v939 = vadd.f32 0.0, %v938
        %v940 = vpop.f32.mrb[0].mxu0
        %941 = vmatprep.mubr.bf16.mxu0 %v816
        %942 = vmatmul.mubr.bf16.gmra.mrb[0].mxu0 %v815
        %v943 = vpop.f32.mrb[0].mxu0
        %v944 = vadd.f32 0.0, %v943
        %v945 = vpop.f32.mrb[0].mxu0
        %v946 = vpop.f32.mrb[0].mxu0
        %v947 = vadd.f32 0.0, %v946
        %v948 = vpop.f32.mrb[0].mxu0
        %949 = vmatprep.mubr.bf16.mxu0 %v818
        %950 = vmatmul.mubr.bf16.gmra.mrb[0].mxu0 %v817
        %v951 = vpop.f32.mrb[0].mxu0
        %v952 = vadd.f32 0.0, %v951
        %v953 = vpop.f32.mrb[0].mxu0
        %v954 = vpop.f32.mrb[0].mxu0
        %v955 = vadd.f32 0.0, %v954
        %v956 = vpop.f32.mrb[0].mxu0
        %957 = vmatprep.mubr.bf16.mxu0 %v820
        %958 = vmatmul.mubr.bf16.gmra.mrb[0].mxu0 %v819
        %v959 = vpop.f32.mrb[0].mxu0
        %v960 = vadd.f32 0.0, %v959
        %v961 = vpop.f32.mrb[0].mxu0
        %v962 = vpop.f32.mrb[0].mxu0
        %v963 = vadd.f32 0.0, %v962
        %v964 = vpop.f32.mrb[0].mxu0
        %965 = vmatprep.mubr.bf16.mxu0 %v822
        %966 = vmatmul.mubr.bf16.gmra.mrb[0].mxu0 %v821
        %v967 = vpop.f32.mrb[0].mxu0
        %v968 = vadd.f32 0.0, %v967
        %v969 = vpop.f32.mrb[0].mxu0
        %v970 = vpop.f32.mrb[0].mxu0
        %v971 = vadd.f32 0.0, %v970
        %v972 = vpop.f32.mrb[0].mxu0
        %973 = vmatprep.mubr.bf16.mxu0 %v824
        %974 = vmatmul.mubr.bf16.gmra.mrb[0].mxu0 %v823
        %v975 = vpop.f32.mrb[0].mxu0
        %v976 = vadd.f32 0.0, %v975
        %v977 = vpop.f32.mrb[0].mxu0
        %v978 = vpop.f32.mrb[0].mxu0
        %v979 = vadd.f32 0.0, %v978
        %v980 = vpop.f32.mrb[0].mxu0
        %981 = vmatprep.mubr.bf16.mxu0 %v826
        %982 = vmatmul.mubr.bf16.gmra.mrb[0].mxu0 %v825
        %v983 = vpop.f32.mrb[0].mxu0
        %v984 = vadd.f32 0.0, %v983
        %v985 = vpop.f32.mrb[0].mxu0
        %v986 = vpop.f32.mrb[0].mxu0
        %v987 = vadd.f32 0.0, %v986
        %v988 = vpop.f32.mrb[0].mxu0
        %989 = vmatprep.mubr.bf16.mxu0 %v828
        %990 = vmatmul.mubr.bf16.gmra.mrb[0].mxu0 %v827
        %v991 = vpop.f32.mrb[0].mxu0
        %v992 = vadd.f32 0.0, %v991
        %v993 = vpop.f32.mrb[0].mxu0
        %v994 = vpop.f32.mrb[0].mxu0
        %v995 = vadd.f32 0.0, %v994
        %v996 = vpop.f32.mrb[0].mxu0
        %997 = vmatprep.mubr.bf16.mxu0 %v830
        %998 = vmatmul.mubr.bf16.gmra.mrb[0].mxu0 %v829
        %v999 = vpop.f32.mrb[0].mxu0
        %v1000 = vadd.f32 0.0, %v999
        %v1001 = vpop.f32.mrb[0].mxu0
        %v1002 = vpop.f32.mrb[0].mxu0
        %v1003 = vadd.f32 0.0, %v1002
        %v1004 = vpop.f32.mrb[0].mxu0
        %1005 = vmatprep.mubr.bf16.mxu0 %v832
        %1006 = vmatmul.mubr.bf16.gmra.mrb[0].mxu0 %v831
        %v1007 = vpop.f32.mrb[0].mxu0
        %v1008 = vadd.f32 0.0, %v1007
        %v1009 = vpop.f32.mrb[0].mxu0
        %v1010 = vpop.f32.mrb[0].mxu0
        %v1011 = vadd.f32 0.0, %v1010
        %v1012 = vpop.f32.mrb[0].mxu0
        %1013 = vmatprep.mubr.bf16.mxu0 %v834
        %1014 = vmatmul.mubr.bf16.gmra.mrb[0].mxu0 %v833
        %v1015 = vpop.f32.mrb[0].mxu0
        %v1016 = vadd.f32 0.0, %v1015
        %v1017 = vpop.f32.mrb[0].mxu0
        %v1018 = vpop.f32.mrb[0].mxu0
        %v1019 = vadd.f32 0.0, %v1018
        %v1020 = vpop.f32.mrb[0].mxu0
        %1021 = vmatprep.mubr.bf16.mxu0 %v836
        %1022 = vmatmul.mubr.bf16.gmra.mrb[0].mxu0 %v835
        %v1023 = vpop.f32.mrb[0].mxu0
        %v1024 = vadd.f32 0.0, %v1023
        %v1025 = vpop.f32.mrb[0].mxu0
        %v1026 = vpop.f32.mrb[0].mxu0
        %v1027 = vadd.f32 0.0, %v1026
        %v1028 = vpop.f32.mrb[0].mxu0
        %1029 = vdwg.mxu0
        %v1030 = vadd.f32 %v625, %v904
        %v1031 = vadd.f32 %v626, %v907
        %v1032 = vadd.f32 %v627, %v912
        %v1033 = vadd.f32 %v628, %v915
        %v1034 = vadd.f32 %v629, %v920
        %v1035 = vadd.f32 %v630, %v923
        %v1036 = vadd.f32 %v631, %v928
        %v1037 = vadd.f32 %v632, %v931
        %v1038 = vadd.f32 %v633, %v936
        %v1039 = vadd.f32 %v634, %v939
        %v1040 = vadd.f32 %v635, %v944
        %v1041 = vadd.f32 %v636, %v947
        %v1042 = vadd.f32 %v637, %v952
        %v1043 = vadd.f32 %v638, %v955
        %v1044 = vadd.f32 %v639, %v960
        %v1045 = vadd.f32 %v640, %v963
        %v1046 = vadd.f32 %v641, %v968
        %v1047 = vadd.f32 %v642, %v971
        %v1048 = vadd.f32 %v643, %v976
        %v1049 = vadd.f32 %v644, %v979
        %v1050 = vadd.f32 %v645, %v984
        %v1051 = vadd.f32 %v646, %v987
        %v1052 = vadd.f32 %v647, %v992
        %v1053 = vadd.f32 %v648, %v995
        %v1054 = vadd.f32 %v649, %v1000
        %v1055 = vadd.f32 %v650, %v1003
        %v1056 = vadd.f32 %v651, %v1008
        %v1057 = vadd.f32 %v652, %v1011
        %v1058 = vadd.f32 %v653, %v1016
        %v1059 = vadd.f32 %v654, %v1019
        %v1060 = vadd.f32 %v655, %v1024
        %v1061 = vadd.f32 %v656, %v1027
        %1062 = vst [vmem:[#allocation4] sm:$0xff] %v1030
        %1063 = vst [vmem:[#allocation4 + $0x8] sm:$0xff] %v1031
        %1064 = vst [vmem:[#allocation4 + $0x10] sm:$0xff] %v1032
        %1065 = vst [vmem:[#allocation4 + $0x18] sm:$0xff] %v1033
        %1066 = vst [vmem:[#allocation4 + $0x20] sm:$0xff] %v1034
        %1067 = vst [vmem:[#allocation4 + $0x28] sm:$0xff] %v1035
        %1068 = vst [vmem:[#allocation4 + $0x30] sm:$0xff] %v1036
        %1069 = vst [vmem:[#allocation4 + $0x38] sm:$0xff] %v1037
        %1070 = vst [vmem:[#allocation4 + $0x40] sm:$0xff] %v1038
        %1071 = vst [vmem:[#allocation4 + $0x48] sm:$0xff] %v1039
        %1072 = vst [vmem:[#allocation4 + $0x50] sm:$0xff] %v1040
        %1073 = vst [vmem:[#allocation4 + $0x58] sm:$0xff] %v1041
        %1074 = vst [vmem:[#allocation4 + $0x60] sm:$0xff] %v1042
        %1075 = vst [vmem:[#allocation4 + $0x68] sm:$0xff] %v1043
        %1076 = vst [vmem:[#allocation4 + $0x70] sm:$0xff] %v1044
        %1077 = vst [vmem:[#allocation4 + $0x78] sm:$0xff] %v1045
        %1078 = vst [vmem:[#allocation4 + $0x80] sm:$0xff] %v1046
        %1079 = vst [vmem:[#allocation4 + $0x88] sm:$0xff] %v1047
        %1080 = vst [vmem:[#allocation4 + $0x90] sm:$0xff] %v1048
        %1081 = vst [vmem:[#allocation4 + $0x98] sm:$0xff] %v1049
        %1082 = vst [vmem:[#allocation4 + $0xa0] sm:$0xff] %v1050
        %1083 = vst [vmem:[#allocation4 + $0xa8] sm:$0xff] %v1051
        %1084 = vst [vmem:[#allocation4 + $0xb0] sm:$0xff] %v1052
        %1085 = vst [vmem:[#allocation4 + $0xb8] sm:$0xff] %v1053
        %1086 = vst [vmem:[#allocation4 + $0xc0] sm:$0xff] %v1054
        %1087 = vst [vmem:[#allocation4 + $0xc8] sm:$0xff] %v1055
        %1088 = vst [vmem:[#allocation4 + $0xd0] sm:$0xff] %v1056
        %1089 = vst [vmem:[#allocation4 + $0xd8] sm:$0xff] %v1057
        %1090 = vst [vmem:[#allocation4 + $0xe0] sm:$0xff] %v1058
        %1091 = vst [vmem:[#allocation4 + $0xe8] sm:$0xff] %v1059
        %1092 = vst [vmem:[#allocation4 + $0xf0] sm:$0xff] %v1060
        %1093 = vst [vmem:[#allocation4 + $0xf8] sm:$0xff] %v1061
        // Predicated region
        $region65: #{tpu_custom_call.1} parent=35 // pred_check
          %p1094 = pneg %p285
        $region66: #{tpu_custom_call.1} parent=35 // pred_check_branch
          %1096 = sbr.rel (%p1094) target = $region68
        $region67: #{tpu_custom_call.1} parent=35 // pred_region
          %v1097 = vld [vmem:[#allocation4] sm:$0xff]
          %v1098 = vld [vmem:[#allocation4 + $0x8] sm:$0xff]
          %v1099 = vld [vmem:[#allocation4 + $0x10] sm:$0xff]
          %v1100 = vld [vmem:[#allocation4 + $0x18] sm:$0xff]
          %v1101 = vld [vmem:[#allocation4 + $0x20] sm:$0xff]
          %v1102 = vld [vmem:[#allocation4 + $0x28] sm:$0xff]
          %v1103 = vld [vmem:[#allocation4 + $0x30] sm:$0xff]
          %v1104 = vld [vmem:[#allocation4 + $0x38] sm:$0xff]
          %v1105 = vld [vmem:[#allocation4 + $0x40] sm:$0xff]
          %v1106 = vld [vmem:[#allocation4 + $0x48] sm:$0xff]
          %v1107 = vld [vmem:[#allocation4 + $0x50] sm:$0xff]
          %v1108 = vld [vmem:[#allocation4 + $0x58] sm:$0xff]
          %v1109 = vld [vmem:[#allocation4 + $0x60] sm:$0xff]
          %v1110 = vld [vmem:[#allocation4 + $0x68] sm:$0xff]
          %v1111 = vld [vmem:[#allocation4 + $0x70] sm:$0xff]
          %v1112 = vld [vmem:[#allocation4 + $0x78] sm:$0xff]
          %v1113 = vld [vmem:[#allocation4 + $0x80] sm:$0xff]
          %v1114 = vld [vmem:[#allocation4 + $0x88] sm:$0xff]
          %v1115 = vld [vmem:[#allocation4 + $0x90] sm:$0xff]
          %v1116 = vld [vmem:[#allocation4 + $0x98] sm:$0xff]
          %v1117 = vld [vmem:[#allocation4 + $0xa0] sm:$0xff]
          %v1118 = vld [vmem:[#allocation4 + $0xa8] sm:$0xff]
          %v1119 = vld [vmem:[#allocation4 + $0xb0] sm:$0xff]
          %v1120 = vld [vmem:[#allocation4 + $0xb8] sm:$0xff]
          %v1121 = vld [vmem:[#allocation4 + $0xc0] sm:$0xff]
          %v1122 = vld [vmem:[#allocation4 + $0xc8] sm:$0xff]
          %v1123 = vld [vmem:[#allocation4 + $0xd0] sm:$0xff]
          %v1124 = vld [vmem:[#allocation4 + $0xd8] sm:$0xff]
          %v1125 = vld [vmem:[#allocation4 + $0xe0] sm:$0xff]
          %v1126 = vld [vmem:[#allocation4 + $0xe8] sm:$0xff]
          %v1127 = vld [vmem:[#allocation4 + $0xf0] sm:$0xff]
          %v1128 = vld [vmem:[#allocation4 + $0xf8] sm:$0xff]
          %v1129 = vld [vmem:[%s279] sm:$0x1]
          %v1131 = vlaneseq
          %v1132 = vshrl.u32 %v1131, 7
          %v1133 = vsub.s32 0, %v1132
          %v1134 = vrot.slane %v1129, %v1133
          %v1136 = vadd.f32 %v1097, %v1134
          %v1137 = vadd.f32 %v1098, %v1134
          %v1138 = vadd.f32 %v1099, %v1134
          %v1139 = vadd.f32 %v1100, %v1134
          %v1140 = vadd.f32 %v1101, %v1134
          %v1141 = vadd.f32 %v1102, %v1134
          %v1142 = vadd.f32 %v1103, %v1134
          %v1143 = vadd.f32 %v1104, %v1134
          %v1144 = vadd.f32 %v1105, %v1134
          %v1145 = vadd.f32 %v1106, %v1134
          %v1146 = vadd.f32 %v1107, %v1134
          %v1147 = vadd.f32 %v1108, %v1134
          %v1148 = vadd.f32 %v1109, %v1134
          %v1149 = vadd.f32 %v1110, %v1134
          %v1150 = vadd.f32 %v1111, %v1134
          %v1151 = vadd.f32 %v1112, %v1134
          %v1152 = vadd.f32 %v1113, %v1134
          %v1153 = vadd.f32 %v1114, %v1134
          %v1154 = vadd.f32 %v1115, %v1134
          %v1155 = vadd.f32 %v1116, %v1134
          %v1156 = vadd.f32 %v1117, %v1134
          %v1157 = vadd.f32 %v1118, %v1134
          %v1158 = vadd.f32 %v1119, %v1134
          %v1159 = vadd.f32 %v1120, %v1134
          %v1160 = vadd.f32 %v1121, %v1134
          %v1161 = vadd.f32 %v1122, %v1134
          %v1162 = vadd.f32 %v1123, %v1134
          %v1163 = vadd.f32 %v1124, %v1134
          %v1164 = vadd.f32 %v1125, %v1134
          %v1165 = vadd.f32 %v1126, %v1134
          %v1166 = vadd.f32 %v1127, %v1134
          %v1167 = vadd.f32 %v1128, %v1134
          %p1168 = scmp.lt.s32.totalorder %s26, 2
          // Predicated region
          $region69: #{tpu_custom_call.1} parent=67 // pred_check
            %p1169 = pneg %p1168
          $region70: #{tpu_custom_call.1} parent=67 // pred_check_branch
            %1171 = sbr.rel (%p1169) target = $region72
          $region71: #{tpu_custom_call.1} parent=67 // pred_region
            %v1172 = vmax.f32 %v1136, 0.0
            %v1173 = vmax.f32 %v1137, 0.0
            %v1174 = vmax.f32 %v1138, 0.0
            %v1175 = vmax.f32 %v1139, 0.0
            %v1176 = vmax.f32 %v1140, 0.0
            %v1177 = vmax.f32 %v1141, 0.0
            %v1178 = vmax.f32 %v1142, 0.0
            %v1179 = vmax.f32 %v1143, 0.0
            %v1180 = vmax.f32 %v1144, 0.0
            %v1181 = vmax.f32 %v1145, 0.0
            %v1182 = vmax.f32 %v1146, 0.0
            %v1183 = vmax.f32 %v1147, 0.0
            %v1184 = vmax.f32 %v1148, 0.0
            %v1185 = vmax.f32 %v1149, 0.0
            %v1186 = vmax.f32 %v1150, 0.0
            %v1187 = vmax.f32 %v1151, 0.0
            %v1188 = vmax.f32 %v1152, 0.0
            %v1189 = vmax.f32 %v1153, 0.0
            %v1190 = vmax.f32 %v1154, 0.0
            %v1191 = vmax.f32 %v1155, 0.0
            %v1192 = vmax.f32 %v1156, 0.0
            %v1193 = vmax.f32 %v1157, 0.0
            %v1194 = vmax.f32 %v1158, 0.0
            %v1195 = vmax.f32 %v1159, 0.0
            %v1196 = vmax.f32 %v1160, 0.0
            %v1197 = vmax.f32 %v1161, 0.0
            %v1198 = vmax.f32 %v1162, 0.0
            %v1199 = vmax.f32 %v1163, 0.0
            %v1200 = vmax.f32 %v1164, 0.0
            %v1201 = vmax.f32 %v1165, 0.0
            %v1202 = vmax.f32 %v1166, 0.0
            %v1203 = vmax.f32 %v1167, 0.0
            %v1204 = vpack.c.bf16 %v1173, %v1172
            %v1205 = vpack.c.bf16 %v1175, %v1174
            %v1206 = vpack.c.bf16 %v1177, %v1176
            %v1207 = vpack.c.bf16 %v1179, %v1178
            %v1208 = vpack.c.bf16 %v1181, %v1180
            %v1209 = vpack.c.bf16 %v1183, %v1182
            %v1210 = vpack.c.bf16 %v1185, %v1184
            %v1211 = vpack.c.bf16 %v1187, %v1186
            %v1212 = vpack.c.bf16 %v1189, %v1188
            %v1213 = vpack.c.bf16 %v1191, %v1190
            %v1214 = vpack.c.bf16 %v1193, %v1192
            %v1215 = vpack.c.bf16 %v1195, %v1194
            %v1216 = vpack.c.bf16 %v1197, %v1196
            %v1217 = vpack.c.bf16 %v1199, %v1198
            %v1218 = vpack.c.bf16 %v1201, %v1200
            %v1219 = vpack.c.bf16 %v1203, %v1202
            %s1220 = sshra.s32 %s307, 4
            %s1221 = sand.u32 %s307, 15
            %s1222 = smul.addr %s1220, 8
            %s1223 = scalar_lea.vmem [#allocation3], %s1222
            %1224 = vst [vmem:[%s1223] sm:$0xff] %v1204
            %1225 = vst [vmem:[%s1223 + $0x8] sm:$0xff] %v1205
            %1226 = vst [vmem:[%s1223 + $0x10] sm:$0xff] %v1206
            %1227 = vst [vmem:[%s1223 + $0x18] sm:$0xff] %v1207
            %1228 = vst [vmem:[%s1223 + $0x20] sm:$0xff] %v1208
            %1229 = vst [vmem:[%s1223 + $0x28] sm:$0xff] %v1209
            %1230 = vst [vmem:[%s1223 + $0x30] sm:$0xff] %v1210
            %1231 = vst [vmem:[%s1223 + $0x38] sm:$0xff] %v1211
            %1232 = vst [vmem:[%s1223 + $0x40] sm:$0xff] %v1212
            %1233 = vst [vmem:[%s1223 + $0x48] sm:$0xff] %v1213
            %1234 = vst [vmem:[%s1223 + $0x50] sm:$0xff] %v1214
            %1235 = vst [vmem:[%s1223 + $0x58] sm:$0xff] %v1215
            %1236 = vst [vmem:[%s1223 + $0x60] sm:$0xff] %v1216
            %1237 = vst [vmem:[%s1223 + $0x68] sm:$0xff] %v1217
            %1238 = vst [vmem:[%s1223 + $0x70] sm:$0xff] %v1218
            %1239 = vst [vmem:[%s1223 + $0x78] sm:$0xff] %v1219
          $region72: #{tpu_custom_call.1} parent=67 // pred_fallthru
            _
          %p1240 = scmp.eq.s32.totalorder %s26, 2
          // Predicated region
          $region73: #{tpu_custom_call.1} parent=67 // pred_check
            %p1241 = pneg %p1240
          $region74: #{tpu_custom_call.1} parent=67 // pred_check_branch
            %1243 = sbr.rel (%p1241) target = $region76
          $region75: #{tpu_custom_call.1} parent=67 // pred_region
            %v1244 = vld [vmem:[#allocation12] sm:$0xff]
            %s1245 = sshra.s32 %s307, 7
            %s1246 = sand.u32 %s307, 127
            %s1247 = smul.addr %s1245, 8
            %s1248 = scalar_lea.vmem [#allocation11], %s1247
            %v1249 = vld [vmem:[%s1248] sm:$0xff]
            %v1250 = vld [vmem:[%s1248 + $0x8] sm:$0xff]
            %1251 = vmatprep.subr.mxu0 0.0
            %1252 = vmatpush1.msra.mxu0 %v1136
            %1253 = vmatprep.subr.mxu0 0.0
            %1254 = vmatpush1.msra.mxu0 %v1137
            %1255 = vmatprep.subr.mxu0 0.0
            %1256 = vmatpush1.msra.mxu0 %v1138
            %1257 = vmatprep.subr.mxu0 0.0
            %1258 = vmatpush1.msra.mxu0 %v1139
            %1259 = vmatprep.subr.mxu0 0.0
            %1260 = vmatpush1.msra.mxu0 %v1140
            %1261 = vmatprep.subr.mxu0 0.0
            %1262 = vmatpush1.msra.mxu0 %v1141
            %1263 = vmatprep.subr.mxu0 0.0
            %1264 = vmatpush1.msra.mxu0 %v1142
            %1265 = vmatprep.subr.mxu0 0.0
            %1266 = vmatpush1.msra.mxu0 %v1143
            %1267 = vmatprep.subr.mxu0 0.0
            %1268 = vmatpush1.msra.mxu0 %v1144
            %1269 = vmatprep.subr.mxu0 0.0
            %1270 = vmatpush1.msra.mxu0 %v1145
            %1271 = vmatprep.subr.mxu0 0.0
            %1272 = vmatpush1.msra.mxu0 %v1146
            %1273 = vmatprep.subr.mxu0 0.0
            %1274 = vmatpush1.msra.mxu0 %v1147
            %1275 = vmatprep.subr.mxu0 0.0
            %1276 = vmatpush1.msra.mxu0 %v1148
            %1277 = vmatprep.subr.mxu0 0.0
            %1278 = vmatpush1.msra.mxu0 %v1149
            %1279 = vmatprep.subr.mxu0 0.0
            %1280 = vmatpush1.msra.mxu0 %v1150
            %1281 = vmatprep.subr.mxu0 0.0
            %1282 = vmatpush1.msra.mxu0 %v1151
            %1283 = vmatprep.subr.mxu0 0.0
            %1284 = vmatpush1.msra.mxu0 %v1152
            %1285 = vmatprep.subr.mxu0 0.0
            %1286 = vmatpush1.msra.mxu0 %v1153
            %1287 = vmatprep.subr.mxu0 0.0
            %1288 = vmatpush1.msra.mxu0 %v1154
            %1289 = vmatprep.subr.mxu0 0.0
            %1290 = vmatpush1.msra.mxu0 %v1155
            %1291 = vmatprep.subr.mxu0 0.0
            %1292 = vmatpush1.msra.mxu0 %v1156
            %1293 = vmatprep.subr.mxu0 0.0
            %1294 = vmatpush1.msra.mxu0 %v1157
            %1295 = vmatprep.subr.mxu0 0.0
            %1296 = vmatpush1.msra.mxu0 %v1158
            %1297 = vmatprep.subr.mxu0 0.0
            %1298 = vmatpush1.msra.mxu0 %v1159
            %1299 = vmatprep.subr.mxu0 0.0
            %1300 = vmatpush1.msra.mxu0 %v1160
            %1301 = vmatprep.subr.mxu0 0.0
            %1302 = vmatpush1.msra.mxu0 %v1161
            %1303 = vmatprep.subr.mxu0 0.0
            %1304 = vmatpush1.msra.mxu0 %v1162
            %1305 = vmatprep.subr.mxu0 0.0
            %1306 = vmatpush1.msra.mxu0 %v1163
            %1307 = vmatprep.subr.mxu0 0.0
            %1308 = vmatpush1.msra.mxu0 %v1164
            %1309 = vmatprep.subr.mxu0 0.0
            %1310 = vmatpush1.msra.mxu0 %v1165
            %1311 = vmatprep.subr.mxu0 0.0
            %1312 = vmatpush1.msra.mxu0 %v1166
            %1313 = vmatprep.subr.mxu0 0.0
            %1314 = vmatpush1.msra.mxu0 %v1167
            %1315 = vmatprep.mubr.f32.mxu0 %v1250
            %1316 = vmatmul.mubr.f32.gmra.mrb[0].mxu0 %v1249
            %v1317 = vpop.f32.mrb[0].mxu0
            %v1318 = vadd.f32 0.0, %v1317
            %v1319 = vpop.f32.mrb[0].mxu0
            %1320 = vdwg.mxu0
            %v1321 = vadd.f32 %v1244, %v1318
            %1322 = vst [vmem:[#allocation12] sm:$0xff] %v1321
          $region76: #{tpu_custom_call.1} parent=67 // pred_fallthru
            _
        $region68: #{tpu_custom_call.1} parent=35 // pred_fallthru
          _
        // Predicated region
        $region77: #{tpu_custom_call.1} parent=35 // pred_check
          %p1323 = pneg %p154
        $region78: #{tpu_custom_call.1} parent=35 // pred_check_branch
          %1325 = sbr.rel (%p1323) target = $region80
        $region79: #{tpu_custom_call.1} parent=35 // pred_region
          %s1327 = ssub.s32 128, 128
          %1328 = vsyncadd [#allocation8], %s1327
          %s1330 = sshll.u32 [#allocation12], 4
          %s1331 = int_to_ptr.vmem [resolvable:$true] %s1330
          %1333 = dma.vmem_to_hbm [thread:$0]  %s1331, 128, %s5, [#allocation8]
        $region80: #{tpu_custom_call.1} parent=35 // pred_fallthru
          _
        // Predicated region
        $region81: #{tpu_custom_call.1} parent=35 // pred_check
          %p1334 = pneg %p154
        $region82: #{tpu_custom_call.1} parent=35 // pred_check_branch
          %1336 = sbr.rel (%p1334) target = $region84
        $region83: #{tpu_custom_call.1} parent=35 // pred_region
          %1337 = dma.done [#allocation8], 128
        $region84: #{tpu_custom_call.1} parent=35 // pred_fallthru
          _
      $region36: #{tpu_custom_call.1} parent=5 // pred_fallthru
        _
      %p1338 = scmp.le.s32.totalorder 2, %s16
      // Predicated region
      $region85: #{tpu_custom_call.1} parent=5 // pred_check
        %p1339 = pneg %p1338
      $region86: #{tpu_custom_call.1} parent=5 // pred_check_branch
        %1341 = sbr.rel (%p1339) target = $region88
      $region87: #{tpu_custom_call.1} parent=5 // pred_region
        %s1342 = ssub.s32 %s16, 2
      $region88: #{tpu_custom_call.1} parent=5 // pred_fallthru
        _
    $region6: #{tpu_custom_call.1} parent=1 // loop_footer
      %s20 = sadd.s32 1, %s16
    $region7: #{tpu_custom_call.1} parent=1 // loop_footer_branch
      %15 = sbr.rel target = $region3
    $region8: #{tpu_custom_call.1} parent=1 // loop_exit
      _
    %1343 = vsyncpa [#allocation7], 1
    %s1344 = scalar_lea.sflag [#allocation7], 1
    %1345 = vsyncpa %s1344, 1
    %1346 = vsyncpa [#allocation10], 1
    %s1347 = scalar_lea.sflag [#allocation10], 1
    %1348 = vsyncpa %s1347, 1
    %1349 = vsyncpa [#allocation8], 1
    %s1350 = scalar_lea.sflag [#allocation8], 1
    %1351 = vsyncpa %s1350, 1
  %1352 = vsyncmov [#allocation5]
  %s1353 = vpop.sfrf %1352
  %p1354 = scmp.eq.s32.totalorder %s1353, 0
  %p1355 = pneg %p1354
  %1357 = shalt.err (%p1355)

</llo_original>
